<compile_context>
chip_gen: v5e
topology: v5e:2x2
jax: 0.10.0
libtpu: 0.0.40
codegen_flags: <defaults>
</compile_context>

<pallas_src>
import jax
import jax.numpy as jnp
from jax.experimental import pallas as pl
from jax.experimental.pallas import tpu as pltpu

L = 500        # hidden width of the feature extractor (fixed in the module)
L_PAD = 512    # lane-aligned padded hidden width used inside the kernel
K = 1          # number of attention heads (fixed in the module)


def attention_mil_kernel(x_ref, w1_ref, b1_ref, wa1_ref, ba1_ref,
                         wa2_ref, ba2_ref, wc_ref, bc_ref,
                         yprob_ref, yhat_ref, a_ref):
    bt, n, f = x_ref.shape                      # static block shape
    x = x_ref[...].reshape(bt * n, f)           # whole tile as one tall matrix

    # feature_extractor_part: Linear(F, L_PAD) + ReLU — one MXU pass for the tile
    h = jnp.dot(x.astype(jnp.bfloat16), w1_ref[...],
                preferred_element_type=jnp.float32) + b1_ref[...]
    H = jnp.maximum(h, 0.0)                                      # (bt*n, Lp) f32

    # attention MLP: Linear(L_PAD, D_PAD) + tanh — one MXU pass for the tile
    att_h = jnp.tanh(
        jnp.dot(H.astype(jnp.bfloat16), wa1_ref[...],
                preferred_element_type=jnp.float32) + ba1_ref[...])  # (bt*n, Dp)

    lp = H.shape[-1]
    dp = att_h.shape[-1]
    H3 = H.reshape(bt, n, lp)                                    # per-bag view
    A3 = att_h.reshape(bt, n, dp)

    # attention scores Linear(D_PAD, 1), batched: VPU multiply + lane reduce -> (bt, n)
    scores = jnp.sum(A3 * wa2_ref[...], axis=-1) + ba2_ref[...]

    # per-bag softmax over the instance (lane) axis, all bags at once
    m = jnp.max(scores, axis=-1, keepdims=True)
    e = jnp.exp(scores - m)
    a_all = e * pl.reciprocal(jnp.sum(e, axis=-1, keepdims=True), approx=True)

    # attention-weighted pooling M_b = A_b @ H_b, batched as mul + sublane reduce
    M = jnp.sum(H3 * a_all[:, :, None], axis=1)                  # (bt, Lp) f32

    # classifier Linear(L_PAD, 1) + sigmoid (numerically stable tanh form)
    logits = jnp.sum(M * wc_ref[...], axis=-1, keepdims=True) + bc_ref[...]  # (bt, 1)
    probs = 0.5 * (jnp.tanh(0.5 * logits) + 1.0)

    # aggregated per-tile output stores (one store per output per grid step)
    a_ref[0] = a_all
    yprob_ref[0] = probs
    yhat_ref[0] = (probs >= 0.5).astype(jnp.float32)


def _pick_b_tile(B, N):
    """Enough rows per tile to fill the MXU M dim (target 256 for v6e/v7x, >=128 for
    v5e), but keep >=2 grid steps when B > 1 so both v7x TensorCores get work."""
    bt = max(1, min(B, max(1, 256 // max(N, 1))))
    if B > 1:
        bt = min(bt, -(-B // 2))
    return bt


def attention_forward(x, packed_params, b_tile=None):
    """x: (B, N, num_att) float32 — B independent bags.

    Returns (Y_prob (B,1), Y_hat (B,1), A (B,N)).  With B == 1 this matches the
    PyTorch forward (which squeezes the leading bag dim) exactly.
    """
    B, N, F = x.shape
    w1, b1, wa1, ba1, wa2r, ba2, wcr, bc = packed_params
    Lp = w1.shape[1]
    Dp = wa1.shape[1]

    bt = b_tile if b_tile is not None else _pick_b_tile(B, N)
    T = -(-B // bt)
    Bp = T * bt
    if Bp != B:                                   # pad to a whole number of tiles
        x = jnp.concatenate([x, jnp.zeros((Bp - B, N, F), x.dtype)], axis=0)

    def const(shape):
        return pl.BlockSpec(shape, lambda t: (0, 0))   # VMEM-resident weights

    y_prob, y_hat, a_rows = pl.pallas_call(
        attention_mil_kernel,
        out_shape=(jax.ShapeDtypeStruct((T, bt, 1), jnp.float32),
                   jax.ShapeDtypeStruct((T, bt, 1), jnp.float32),
                   jax.ShapeDtypeStruct((T, bt, N), jnp.float32)),
        grid=(T,),
        in_specs=[
            pl.BlockSpec((bt, N, F), lambda t: (t, 0, 0)),   # x: one bag-tile per step
            const((F, Lp)),    # w1   (bf16)
            const((1, Lp)),    # b1
            const((Lp, Dp)),   # wa1  (bf16)
            const((1, Dp)),    # ba1
            const((1, Dp)),    # wa2 as lane-dense row
            const((1, 1)),     # ba2
            const((1, Lp)),    # wc as lane-dense row
            const((1, 1)),     # bc
        ],
        out_specs=(pl.BlockSpec((1, bt, 1), lambda t: (t, 0, 0)),
                   pl.BlockSpec((1, bt, 1), lambda t: (t, 0, 0)),
                   pl.BlockSpec((1, bt, N), lambda t: (t, 0, 0))),
        compiler_params=pltpu.CompilerParams(
            dimension_semantics=("parallel",)),
    )(x, w1, b1, wa1, ba1, wa2r, ba2, wcr, bc)

    y_prob = y_prob.reshape(Bp, 1)[:B]
    y_hat = y_hat.reshape(Bp, 1)[:B]
    a_rows = a_rows.reshape(Bp, N)[:B]
    return y_prob, y_hat, a_rows


def init_params(key, num_att, D):
    """torch.nn.Linear default init (U(-1/sqrt(fan_in), +)), weights stored (in, out)."""
    ks = jax.random.split(key, 8)

    def lin(kw, kb, fan_in, fan_out):
        bound = 1.0 / jnp.sqrt(jnp.float32(fan_in))
        w = jax.random.uniform(kw, (fan_in, fan_out), jnp.float32, -bound, bound)
        b = jax.random.uniform(kb, (1, fan_out), jnp.float32, -bound, bound)
        return w, b

    w1, b1 = lin(ks[0], ks[1], num_att, L)      # feature_extractor Linear(num_att, L)
    wa1, ba1 = lin(ks[2], ks[3], L, D)          # attention Linear(L, D)
    wa2, ba2 = lin(ks[4], ks[5], D, K)          # attention Linear(D, K)
    wc, bc = lin(ks[6], ks[7], L * K, 1)        # classifier Linear(L*K, 1)
    return (w1, b1, wa1, ba1, wa2, ba2, wc, bc)


def pack_params(params):
    """One-time repack for the kernel: pad L 500->512 and D up to a multiple of 128
    (lane-aligned), turn the 1-wide weights into lane-dense rows, store the two big
    weights in bf16.  All pads are zero => mathematically inert (relu(0)=0, tanh(0)=0,
    padded wa2/wc entries are zero)."""
    w1, b1, wa1, ba1, wa2, ba2, wc, bc = params
    lpad = L_PAD - L
    D = wa1.shape[1]
    Dp = -(-D // 128) * 128
    dpad = Dp - D
    w1p = jnp.pad(w1, ((0, 0), (0, lpad))).astype(jnp.bfloat16)       # (F, 512)
    b1p = jnp.pad(b1, ((0, 0), (0, lpad)))                            # (1, 512)
    wa1p = jnp.pad(wa1, ((0, lpad), (0, dpad))).astype(jnp.bfloat16)  # (512, Dp)
    ba1p = jnp.pad(ba1, ((0, 0), (0, dpad)))                          # (1, Dp)
    wa2r = jnp.pad(wa2.T, ((0, 0), (0, dpad)))                        # (1, Dp)
    wcr = jnp.pad(wc, ((0, lpad), (0, 0))).T                          # (1, 512)
    return (w1p, b1p, wa1p, ba1p, wa2r, ba2, wcr, bc)


def attention_forward_ref(x, params):
    """Pure-JAX reference (unpadded L=500, D) mirroring the kernel's bf16-weight policy."""
    w1, b1, wa1, ba1, wa2, ba2, wc, bc = params
    w1b = w1.astype(jnp.bfloat16)
    wa1b = wa1.astype(jnp.bfloat16)

    def one_bag(x2):                            # x2: (N, F)
        H = jnp.maximum(
            jnp.dot(x2.astype(jnp.bfloat16), w1b,
                    preferred_element_type=jnp.float32) + b1, 0.0)
        att_h = jnp.tanh(
            jnp.dot(H.astype(jnp.bfloat16), wa1b,
                    preferred_element_type=jnp.float32) + ba1)
        A = (att_h @ wa2 + ba2).T               # (1, N)
        A = jax.nn.softmax(A, axis=1)
        M = A @ H                               # (1, L)
        Y_prob = jax.nn.sigmoid(M @ wc + bc)    # (1, 1)
        Y_hat = (Y_prob >= 0.5).astype(jnp.float32)
        return Y_prob[0], Y_hat[0], A[0]

    Yp, Yh, A = jax.vmap(one_bag)(x)
    return Yp, Yh, A                            # (B,1), (B,1), (B,N)


if __name__ == "__main__":
    num_att = 32   # per-instance feature dimension
    D_att = 64     # attention hidden dim (padded to 128 inside the kernel)
    N = 8          # number of instances per bag
    B = 8          # number of bags batched through one pallas_call

    key = jax.random.PRNGKey(0)
    k_param, k_x = jax.random.split(key)
    params = init_params(k_param, num_att, D_att)
    packed = pack_params(params)
    x = jax.random.normal(k_x, (B, N, num_att), jnp.float32)

    # b_tile=4 -> 32-row matmuls per step, grid=(2,) so both v7x TCs get a tile
    Y_prob, Y_hat, A = attention_forward(x, packed, b_tile=4)
    jax.block_until_ready((Y_prob, Y_hat, A))

    # correctness vs pure-JAX reference
    Yp_ref, Yh_ref, A_ref = attention_forward_ref(x, params)
    assert Y_prob.shape == (B, 1) and Y_hat.shape == (B, 1) and A.shape == (B, N)
    assert jnp.allclose(Y_prob, Yp_ref, atol=1e-3, rtol=1e-3), (Y_prob, Yp_ref)
    assert jnp.allclose(A, A_ref, atol=1e-3, rtol=1e-3), (A, A_ref)
    assert jnp.array_equal(Y_hat, (Y_prob >= 0.5).astype(jnp.float32))

    # single-bag call reproduces the PyTorch forward contract exactly
    yp1, yh1, a1 = attention_forward(x[:1], packed)
    jax.block_until_ready((yp1, yh1, a1))
    assert yp1.shape == (1, 1) and yh1.shape == (1, 1) and a1.shape == (1, N)
    assert jnp.allclose(yp1, Y_prob[:1], atol=1e-5)

    # non-divisible batch exercises the bag-padding path
    yp5, yh5, a5 = attention_forward(x[:5], packed, b_tile=4)
    jax.block_until_ready((yp5, yh5, a5))
    assert yp5.shape == (5, 1) and jnp.allclose(yp5, Y_prob[:5], atol=1e-5)

    print("KERNEL_OK")
</pallas_src>

<mosaic_0001>
module attributes {stable_mosaic.version = 11 : i64} {
  func.func @attention_mil_kernel(%arg0: i32, %arg1: memref<4x8x32xf32, #tpu.memory_space<vmem>>, %arg2: memref<32x512xbf16, #tpu.memory_space<vmem>>, %arg3: memref<1x512xf32, #tpu.memory_space<vmem>>, %arg4: memref<512x128xbf16, #tpu.memory_space<vmem>>, %arg5: memref<1x128xf32, #tpu.memory_space<vmem>>, %arg6: memref<1x128xf32, #tpu.memory_space<vmem>>, %arg7: memref<1x1xf32, #tpu.memory_space<vmem>>, %arg8: memref<1x512xf32, #tpu.memory_space<vmem>>, %arg9: memref<1x1xf32, #tpu.memory_space<vmem>>, %arg10: memref<1x4x1xf32, #tpu.memory_space<vmem>>, %arg11: memref<1x4x1xf32, #tpu.memory_space<vmem>>, %arg12: memref<1x4x8xf32, #tpu.memory_space<vmem>>) attributes {dimension_semantics = [#tpu.dimension_semantics<parallel>], iteration_bounds = array<i64: 2>, scalar_prefetch = 0 : i64, scratch_operands = 0 : i64, tpu.core_type = #tpu.core_type<tc>, window_params = [{transform_indices = @transform_0, window_bounds = array<i64: 4, 8, 32>}, {pipeline_mode = #tpu.pipeline_mode<synchronous>, transform_indices = @transform_1, window_bounds = array<i64: 32, 512>}, {pipeline_mode = #tpu.pipeline_mode<synchronous>, transform_indices = @transform_2, window_bounds = array<i64: 1, 512>}, {pipeline_mode = #tpu.pipeline_mode<synchronous>, transform_indices = @transform_3, window_bounds = array<i64: 512, 128>}, {pipeline_mode = #tpu.pipeline_mode<synchronous>, transform_indices = @transform_4, window_bounds = array<i64: 1, 128>}, {pipeline_mode = #tpu.pipeline_mode<synchronous>, transform_indices = @transform_5, window_bounds = array<i64: 1, 128>}, {pipeline_mode = #tpu.pipeline_mode<synchronous>, transform_indices = @transform_6, window_bounds = array<i64: 1, 1>}, {pipeline_mode = #tpu.pipeline_mode<synchronous>, transform_indices = @transform_7, window_bounds = array<i64: 1, 512>}, {pipeline_mode = #tpu.pipeline_mode<synchronous>, transform_indices = @transform_8, window_bounds = array<i64: 1, 1>}, {transform_indices = @transform_9, window_bounds = array<i64: 1, 4, 1>}, {transform_indices = @transform_10, window_bounds = array<i64: 1, 4, 1>}, {transform_indices = @transform_11, window_bounds = array<i64: 1, 4, 8>}]} {
    %c0 = arith.constant 0 : index
    %c0_0 = arith.constant 0 : index
    %c0_1 = arith.constant 0 : index
    %0 = vector.load %arg1[%c0, %c0_0, %c0_1] : memref<4x8x32xf32, #tpu.memory_space<vmem>>, vector<4x8x32xf32>
    %1 = vector.shape_cast %0 : vector<4x8x32xf32> to vector<32x32xf32>
    %2 = arith.truncf %1 : vector<32x32xf32> to vector<32x32xbf16>
    %c0_2 = arith.constant 0 : index
    %c0_3 = arith.constant 0 : index
    %3 = vector.load %arg2[%c0_2, %c0_3] : memref<32x512xbf16, #tpu.memory_space<vmem>>, vector<32x512xbf16>
    %cst = arith.constant dense<0.000000e+00> : vector<32x512xf32>
    %4 = tpu.matmul %2, %3, %cst {dimension_numbers = #tpu.dot_dimension_numbers<[1], [0], [0], [1], [0, 0, 1, 1], [], []>} : vector<32x32xbf16>, vector<32x512xbf16>, vector<32x512xf32> -> vector<32x512xf32>
    %c0_4 = arith.constant 0 : index
    %c0_5 = arith.constant 0 : index
    %5 = vector.load %arg3[%c0_4, %c0_5] : memref<1x512xf32, #tpu.memory_space<vmem>>, vector<1x512xf32>
    %6 = vector.broadcast %5 : vector<1x512xf32> to vector<32x512xf32>
    %7 = arith.addf %4, %6 : vector<32x512xf32>
    %cst_6 = arith.constant 0.000000e+00 : f32
    %8 = vector.broadcast %cst_6 : f32 to vector<32x512xf32>
    %9 = arith.maximumf %7, %8 : vector<32x512xf32>
    %10 = arith.truncf %9 : vector<32x512xf32> to vector<32x512xbf16>
    %c0_7 = arith.constant 0 : index
    %c0_8 = arith.constant 0 : index
    %11 = vector.load %arg4[%c0_7, %c0_8] : memref<512x128xbf16, #tpu.memory_space<vmem>>, vector<512x128xbf16>
    %cst_9 = arith.constant dense<0.000000e+00> : vector<32x128xf32>
    %12 = tpu.matmul %10, %11, %cst_9 {dimension_numbers = #tpu.dot_dimension_numbers<[1], [0], [0], [1], [0, 0, 1, 1], [], []>} : vector<32x512xbf16>, vector<512x128xbf16>, vector<32x128xf32> -> vector<32x128xf32>
    %c0_10 = arith.constant 0 : index
    %c0_11 = arith.constant 0 : index
    %13 = vector.load %arg5[%c0_10, %c0_11] : memref<1x128xf32, #tpu.memory_space<vmem>>, vector<1x128xf32>
    %14 = vector.broadcast %13 : vector<1x128xf32> to vector<32x128xf32>
    %15 = arith.addf %12, %14 : vector<32x128xf32>
    %16 = math.tanh %15 : vector<32x128xf32>
    %17 = vector.shape_cast %9 : vector<32x512xf32> to vector<4x8x512xf32>
    %18 = vector.shape_cast %16 : vector<32x128xf32> to vector<4x8x128xf32>
    %c0_12 = arith.constant 0 : index
    %c0_13 = arith.constant 0 : index
    %19 = vector.load %arg6[%c0_12, %c0_13] : memref<1x128xf32, #tpu.memory_space<vmem>>, vector<1x128xf32>
    %20 = vector.shape_cast %19 : vector<1x128xf32> to vector<1x1x128xf32>
    %21 = vector.broadcast %20 : vector<1x1x128xf32> to vector<4x8x128xf32>
    %22 = arith.mulf %18, %21 : vector<4x8x128xf32>
    %cst_14 = arith.constant dense<0.000000e+00> : vector<4x8xf32>
    %23 = vector.multi_reduction <add>, %22, %cst_14 [2] : vector<4x8x128xf32> to vector<4x8xf32>
    %c0_15 = arith.constant 0 : index
    %c0_16 = arith.constant 0 : index
    %24 = vector.load %arg7[%c0_15, %c0_16] : memref<1x1xf32, #tpu.memory_space<vmem>>, vector<1x1xf32>
    %25 = vector.broadcast %24 : vector<1x1xf32> to vector<4x8xf32>
    %26 = arith.addf %23, %25 : vector<4x8xf32>
    %cst_17 = arith.constant dense<0xFF800000> : vector<4xf32>
    %27 = vector.multi_reduction <maximumf>, %26, %cst_17 [1] : vector<4x8xf32> to vector<4xf32>
    %28 = vector.shape_cast %27 : vector<4xf32> to vector<4x1xf32>
    %29 = vector.broadcast %28 : vector<4x1xf32> to vector<4x8xf32>
    %30 = arith.subf %26, %29 : vector<4x8xf32>
    %31 = math.exp %30 : vector<4x8xf32>
    %cst_18 = arith.constant dense<0.000000e+00> : vector<4xf32>
    %32 = vector.multi_reduction <add>, %31, %cst_18 [1] : vector<4x8xf32> to vector<4xf32>
    %33 = vector.shape_cast %32 : vector<4xf32> to vector<4x1xf32>
    %34 = tpu.reciprocal %33 {approx = true} : vector<4x1xf32> -> vector<4x1xf32>
    %35 = vector.broadcast %34 : vector<4x1xf32> to vector<4x8xf32>
    %36 = arith.mulf %31, %35 : vector<4x8xf32>
    %37 = vector.shape_cast %36 : vector<4x8xf32> to vector<4x8x1xf32>
    %38 = vector.broadcast %37 : vector<4x8x1xf32> to vector<4x8x512xf32>
    %39 = arith.mulf %17, %38 : vector<4x8x512xf32>
    %cst_19 = arith.constant dense<0.000000e+00> : vector<4x512xf32>
    %40 = vector.multi_reduction <add>, %39, %cst_19 [1] : vector<4x8x512xf32> to vector<4x512xf32>
    %c0_20 = arith.constant 0 : index
    %c0_21 = arith.constant 0 : index
    %41 = vector.load %arg8[%c0_20, %c0_21] : memref<1x512xf32, #tpu.memory_space<vmem>>, vector<1x512xf32>
    %42 = vector.broadcast %41 : vector<1x512xf32> to vector<4x512xf32>
    %43 = arith.mulf %40, %42 : vector<4x512xf32>
    %cst_22 = arith.constant dense<0.000000e+00> : vector<4xf32>
    %44 = vector.multi_reduction <add>, %43, %cst_22 [1] : vector<4x512xf32> to vector<4xf32>
    %45 = vector.shape_cast %44 : vector<4xf32> to vector<4x1xf32>
    %c0_23 = arith.constant 0 : index
    %c0_24 = arith.constant 0 : index
    %46 = vector.load %arg9[%c0_23, %c0_24] : memref<1x1xf32, #tpu.memory_space<vmem>>, vector<1x1xf32>
    %47 = vector.broadcast %46 : vector<1x1xf32> to vector<4x1xf32>
    %48 = arith.addf %45, %47 : vector<4x1xf32>
    %cst_25 = arith.constant 5.000000e-01 : f32
    %49 = vector.broadcast %cst_25 : f32 to vector<4x1xf32>
    %50 = arith.mulf %49, %48 : vector<4x1xf32>
    %51 = math.tanh %50 : vector<4x1xf32>
    %cst_26 = arith.constant 1.000000e+00 : f32
    %52 = vector.broadcast %cst_26 : f32 to vector<4x1xf32>
    %53 = arith.addf %51, %52 : vector<4x1xf32>
    %cst_27 = arith.constant 5.000000e-01 : f32
    %54 = vector.broadcast %cst_27 : f32 to vector<4x1xf32>
    %55 = arith.mulf %54, %53 : vector<4x1xf32>
    %c0_28 = arith.constant 0 : index
    %c0_29 = arith.constant 0 : index
    %c0_30 = arith.constant 0 : index
    %56 = vector.load %arg12[%c0_28, %c0_29, %c0_30] : memref<1x4x8xf32, #tpu.memory_space<vmem>>, vector<1x4x8xf32>
    %57 = vector.shape_cast %56 : vector<1x4x8xf32> to vector<4x8xf32>
    %58 = vector.shape_cast %36 : vector<4x8xf32> to vector<1x4x8xf32>
    tpu.vector_store %arg12[%c0_28, %c0_29, %c0_30], %58 {strides = array<i32>} : memref<1x4x8xf32, #tpu.memory_space<vmem>>, vector<1x4x8xf32>,
    %c0_31 = arith.constant 0 : index
    %c0_32 = arith.constant 0 : index
    %c0_33 = arith.constant 0 : index
    %59 = vector.load %arg10[%c0_31, %c0_32, %c0_33] : memref<1x4x1xf32, #tpu.memory_space<vmem>>, vector<1x4x1xf32>
    %60 = vector.shape_cast %59 : vector<1x4x1xf32> to vector<4x1xf32>
    %61 = vector.shape_cast %55 : vector<4x1xf32> to vector<1x4x1xf32>
    tpu.vector_store %arg10[%c0_31, %c0_32, %c0_33], %61 {strides = array<i32>} : memref<1x4x1xf32, #tpu.memory_space<vmem>>, vector<1x4x1xf32>,
    %cst_34 = arith.constant 5.000000e-01 : f32
    %62 = vector.broadcast %cst_34 : f32 to vector<4x1xf32>
    %63 = arith.cmpf oge, %55, %62 : vector<4x1xf32>
    %64 = arith.extui %63 : vector<4x1xi1> to vector<4x1xi32>
    %65 = arith.sitofp %64 : vector<4x1xi32> to vector<4x1xf32>
    %c0_35 = arith.constant 0 : index
    %c0_36 = arith.constant 0 : index
    %c0_37 = arith.constant 0 : index
    %66 = vector.load %arg11[%c0_35, %c0_36, %c0_37] : memref<1x4x1xf32, #tpu.memory_space<vmem>>, vector<1x4x1xf32>
    %67 = vector.shape_cast %66 : vector<1x4x1xf32> to vector<4x1xf32>
    %68 = vector.shape_cast %65 : vector<4x1xf32> to vector<1x4x1xf32>
    tpu.vector_store %arg11[%c0_35, %c0_36, %c0_37], %68 {strides = array<i32>} : memref<1x4x1xf32, #tpu.memory_space<vmem>>, vector<1x4x1xf32>,
    return
  }
  func.func @transform_0(%arg0: i32) -> (i32, i32, i32) {
    %c0_i32 = arith.constant 0 : i32
    %c0_i32_0 = arith.constant 0 : i32
    %c0_i32_1 = arith.constant 0 : i32
    return %arg0, %c0_i32, %c0_i32_0 : i32, i32, i32
  }
  func.func @transform_1(%arg0: i32) -> (i32, i32) {
    %c0_i32 = arith.constant 0 : i32
    %c0_i32_0 = arith.constant 0 : i32
    %c0_i32_1 = arith.constant 0 : i32
    return %c0_i32, %c0_i32_0 : i32, i32
  }
  func.func @transform_2(%arg0: i32) -> (i32, i32) {
    %c0_i32 = arith.constant 0 : i32
    %c0_i32_0 = arith.constant 0 : i32
    %c0_i32_1 = arith.constant 0 : i32
    return %c0_i32, %c0_i32_0 : i32, i32
  }
  func.func @transform_3(%arg0: i32) -> (i32, i32) {
    %c0_i32 = arith.constant 0 : i32
    %c0_i32_0 = arith.constant 0 : i32
    %c0_i32_1 = arith.constant 0 : i32
    return %c0_i32, %c0_i32_0 : i32, i32
  }
  func.func @transform_4(%arg0: i32) -> (i32, i32) {
    %c0_i32 = arith.constant 0 : i32
    %c0_i32_0 = arith.constant 0 : i32
    %c0_i32_1 = arith.constant 0 : i32
    return %c0_i32, %c0_i32_0 : i32, i32
  }
  func.func @transform_5(%arg0: i32) -> (i32, i32) {
    %c0_i32 = arith.constant 0 : i32
    %c0_i32_0 = arith.constant 0 : i32
    %c0_i32_1 = arith.constant 0 : i32
    return %c0_i32, %c0_i32_0 : i32, i32
  }
  func.func @transform_6(%arg0: i32) -> (i32, i32) {
    %c0_i32 = arith.constant 0 : i32
    %c0_i32_0 = arith.constant 0 : i32
    %c0_i32_1 = arith.constant 0 : i32
    return %c0_i32, %c0_i32_0 : i32, i32
  }
  func.func @transform_7(%arg0: i32) -> (i32, i32) {
    %c0_i32 = arith.constant 0 : i32
    %c0_i32_0 = arith.constant 0 : i32
    %c0_i32_1 = arith.constant 0 : i32
    return %c0_i32, %c0_i32_0 : i32, i32
  }
  func.func @transform_8(%arg0: i32) -> (i32, i32) {
    %c0_i32 = arith.constant 0 : i32
    %c0_i32_0 = arith.constant 0 : i32
    %c0_i32_1 = arith.constant 0 : i32
    return %c0_i32, %c0_i32_0 : i32, i32
  }
  func.func @transform_9(%arg0: i32) -> (i32, i32, i32) {
    %c0_i32 = arith.constant 0 : i32
    %c0_i32_0 = arith.constant 0 : i32
    %c0_i32_1 = arith.constant 0 : i32
    return %arg0, %c0_i32, %c0_i32_0 : i32, i32, i32
  }
  func.func @transform_10(%arg0: i32) -> (i32, i32, i32) {
    %c0_i32 = arith.constant 0 : i32
    %c0_i32_0 = arith.constant 0 : i32
    %c0_i32_1 = arith.constant 0 : i32
    return %arg0, %c0_i32, %c0_i32_0 : i32, i32, i32
  }
  func.func @transform_11(%arg0: i32) -> (i32, i32, i32) {
    %c0_i32 = arith.constant 0 : i32
    %c0_i32_0 = arith.constant 0 : i32
    %c0_i32_1 = arith.constant 0 : i32
    return %arg0, %c0_i32, %c0_i32_0 : i32, i32, i32
  }
}

</mosaic_0001>

<llo_original>
// kernel: tpu_custom_call.1
$region0: #{tpu_custom_call.1}
  #allocation0 [shape = 'u32[]', space=smem, size = 0x4, offset = 0x4, fixed_abs, tag = 'smem constant byte address 0x4 - core index']
  #allocation1 [shape = 'u32[72,128]{1,0:T(1,128)}', space=vmem, size = 0x9000, scoped, tag = 'internal scratch']
  #allocation2 [shape = 'f32[1,1]{1,0:T(1,128)S(1)}', space=vmem, size = 0x200, scoped, tag = 'scoped memory for tpu_custom_call.1']
  #allocation3 [shape = 'f32[1,1]{1,0:T(1,128)S(1)}', space=vmem, size = 0x200, scoped, tag = 'scoped memory for tpu_custom_call.1']
  %s0 = inlined_call_operand.hbm [shape: f32[8,8,32], index: 0, kind: input, shape index: {}]
  %s1 = inlined_call_operand.hbm [shape: bf16[32,512], index: 1, kind: input, shape index: {}]
  %s2 = inlined_call_operand.vmem [shape: f32[1,512], index: 2, kind: input, shape index: {}]
  %s3 = inlined_call_operand.hbm [shape: bf16[512,128], index: 3, kind: input, shape index: {}]
  %s4 = inlined_call_operand.hbm [shape: f32[1,128], index: 4, kind: input, shape index: {}]
  %s5 = inlined_call_operand.hbm [shape: f32[1,128], index: 5, kind: input, shape index: {}]
  %s6 = inlined_call_operand.<no memory space> [shape: f32[1,1], index: 6, kind: input, shape index: {}]
  %s7 = inlined_call_operand.vmem [shape: f32[1,512], index: 7, kind: input, shape index: {}]
  %s8 = inlined_call_operand.<no memory space> [shape: f32[1,1], index: 8, kind: input, shape index: {}]
  %s9 = inlined_call_operand.vmem [shape: f32[2,4,1], index: 9, kind: output, shape index: {0}]
  %s10 = inlined_call_operand.vmem [shape: f32[2,4,1], index: 10, kind: output, shape index: {1}]
  %s11 = inlined_call_operand.hbm [shape: f32[2,4,8], index: 11, kind: output, shape index: {2}]
  %12 = xla_tuple %s9, %s10, %s11
  %s13 = sld [smem:[#allocation0]]
  $region105: #{tpu_custom_call.1} parent=0
    _
  %s15 = ssub.s32 1, %s13
  %s16 = scalar_select 0, %s15, %s13
  %v17 = vstv %s6
  %18 = vst [vmem:[#allocation2] sm:$0x1] %v17
  %v19 = vstv %s8
  %20 = vst [vmem:[#allocation3] sm:$0x1] %v19
  $region1: #{tpu_custom_call.1} parent=0
    #allocation4 [shape = 'u8[32768]{0}', space=vmem, size = 0x8000, scoped, tag = 'input window, operand 0']
    #allocation5 [shape = 's32[2]{0}', space=sflag, size = 0x8, scoped, tag = 'scoped memory for tpu_custom_call.1']
    #allocation6 [shape = 's32[2]{0}', space=sflag, size = 0x8, scoped, tag = 'scoped memory for tpu_custom_call.1']
    #allocation7 [shape = 'u8[32768]{0}', space=vmem, size = 0x8000, scoped, tag = 'input window, operand 1, single buffered']
    #allocation8 [shape = 's32[1]{0}', space=sflag, size = 0x4, scoped, tag = 'scoped memory for tpu_custom_call.1']
    #allocation9 [shape = 'u8[131072]{0}', space=vmem, size = 0x20000, scoped, tag = 'input window, operand 3, single buffered']
    #allocation10 [shape = 'u8[512]{0}', space=vmem, size = 0x400, scoped, tag = 'input window, operand 4, single buffered']
    #allocation11 [shape = 's32[1]{0}', space=sflag, size = 0x4, scoped, tag = 'scoped memory for tpu_custom_call.1']
    #allocation12 [shape = 'u8[512]{0}', space=vmem, size = 0x400, scoped, tag = 'input window, operand 5, single buffered']
    #allocation13 [shape = 'u8[4096]{0}', space=vmem, size = 0x1000, scoped, tag = 'output window, operand 2']
    %21 = vsyncpa [#allocation5], 0
    %s22 = scalar_lea.sflag [#allocation5], 1
    %23 = vsyncpa %s22, 0
    %24 = vsyncpa [#allocation8], 0
    %25 = vsyncpa [#allocation11], 0
    %26 = vsyncpa [#allocation6], 0
    %s27 = scalar_lea.sflag [#allocation6], 1
    %28 = vsyncpa %s27, 0
    loop: start=0, step=1, limit=4
    $region2: #{tpu_custom_call.1} parent=1 // loop_pre_header
      _
    $region3: #{tpu_custom_call.1} parent=1 // loop_header
      %s30 = sphi 0, %s34
      %p31 = scmp.ge.s32.totalorder %s30, 4
      %s40 = sphi 0, %s42
      %s43 = sphi 0, %s40
      %s44 = sphi 0, %s43
      %s60 = sphi 0, %s44
      %s64 = sphi 0, %s64
      %s66 = sphi 0, %s64
      %s67 = sphi 0, %s66
      %s81 = sphi 0, %s67
      %s85 = sphi 0, %s85
      %s87 = sphi 0, %s85
      %s88 = sphi 0, %s87
      %s102 = sphi 0, %s88
      %s106 = sphi 0, %s106
      %s108 = sphi 0, %s106
      %s109 = sphi 0, %s108
      %s123 = sphi 0, %s109
      %s127 = sphi 0, %s127
      %s129 = sphi 0, %s127
      %s130 = sphi 0, %s129
      %s144 = sphi 0, %s130
      %s148 = sphi 0, %s148
      %s150 = sphi 0, %s148
      %s151 = sphi 0, %s150
      %s165 = sphi 0, %s151
      %s169 = sphi 0, %s169
      %s171 = sphi 0, %s169
      %s172 = sphi 0, %s171
      %s186 = sphi 0, %s172
      %s190 = sphi 0, %s190
      %s192 = sphi 0, %s190
      %s193 = sphi 0, %s192
      %s207 = sphi 0, %s193
      %s211 = sphi 0, %s211
      %s213 = sphi 0, %s211
      %s214 = sphi 0, %s213
      %s228 = sphi 0, %s214
      %s234 = sphi 0, %s236
      %s237 = sphi 0, %s234
      %s238 = sphi 0, %s237
      %s254 = sphi 0, %s238
      %s260 = sphi 0, %s262
      %s263 = sphi 0, %s260
      %s264 = sphi 0, %s263
      %s280 = sphi 0, %s264
      %s286 = sphi 0, %s288
      %s289 = sphi 0, %s286
      %s290 = sphi 0, %s289
      %s306 = sphi 0, %s290
    $region4: #{tpu_custom_call.1} parent=1 // loop_header_branch
      %33 = sbr.rel (%p31) target = $region8
    $region5: #{tpu_custom_call.1} parent=1 // loop_body
      %s35 = ssub.s32 %s30, 1
      %s36 = ssub.s32 %s30, 2
      %s37 = sadd.s32 %s30, 1
      %s38 = ssub.s32 %s30, %s37
      %p39 = scmp.eq.s32.totalorder %s38, 0
      %s41 = sadd.s32 %s40, 1
      %s42 = scalar_select %p39, %s40, %s41
      %p45 = pneg %p39
      %p46 = scmp.eq.s32.totalorder %s30, 1
      %p47 = por %p45, %p46
      %p48 = scmp.ne.s32.totalorder %s40, %s43
      %p49 = scmp.eq.s32.totalorder %s30, 0
      %p50 = por %p48, %p49
      %p51 = scmp.ne.s32.totalorder %s40, %s43
      %p52 = scmp.eq.s32.totalorder %s35, 1
      %p53 = por %p51, %p52
      %p54 = scmp.ne.s32.totalorder %s43, %s44
      %p55 = scmp.eq.s32.totalorder %s35, 0
      %p56 = por %p54, %p55
      %p57 = scmp.ne.s32.totalorder %s43, %s44
      %p58 = scmp.eq.s32.totalorder %s36, 1
      %p59 = por %p57, %p58
      %p61 = scmp.ne.s32.totalorder %s44, %s60
      %p62 = scmp.eq.s32.totalorder %s36, 0
      %p63 = por %p61, %p62
      %s65 = sadd.s32 %s64, 1
      %p68 = scmp.eq.s32.totalorder %s30, 1
      %p69 = scmp.ne.s32.totalorder %s64, %s66
      %p70 = scmp.eq.s32.totalorder %s30, 0
      %p71 = por %p69, %p70
      %p72 = scmp.ne.s32.totalorder %s64, %s66
      %p73 = scmp.eq.s32.totalorder %s35, 1
      %p74 = por %p72, %p73
      %p75 = scmp.ne.s32.totalorder %s66, %s67
      %p76 = scmp.eq.s32.totalorder %s35, 0
      %p77 = por %p75, %p76
      %p78 = scmp.ne.s32.totalorder %s66, %s67
      %p79 = scmp.eq.s32.totalorder %s36, 1
      %p80 = por %p78, %p79
      %p82 = scmp.ne.s32.totalorder %s67, %s81
      %p83 = scmp.eq.s32.totalorder %s36, 0
      %p84 = por %p82, %p83
      %s86 = sadd.s32 %s85, 1
      %p89 = scmp.eq.s32.totalorder %s30, 1
      %p90 = scmp.ne.s32.totalorder %s85, %s87
      %p91 = scmp.eq.s32.totalorder %s30, 0
      %p92 = por %p90, %p91
      %p93 = scmp.ne.s32.totalorder %s85, %s87
      %p94 = scmp.eq.s32.totalorder %s35, 1
      %p95 = por %p93, %p94
      %p96 = scmp.ne.s32.totalorder %s87, %s88
      %p97 = scmp.eq.s32.totalorder %s35, 0
      %p98 = por %p96, %p97
      %p99 = scmp.ne.s32.totalorder %s87, %s88
      %p100 = scmp.eq.s32.totalorder %s36, 1
      %p101 = por %p99, %p100
      %p103 = scmp.ne.s32.totalorder %s88, %s102
      %p104 = scmp.eq.s32.totalorder %s36, 0
      %p105 = por %p103, %p104
      %s107 = sadd.s32 %s106, 1
      %p110 = scmp.eq.s32.totalorder %s30, 1
      %p111 = scmp.ne.s32.totalorder %s106, %s108
      %p112 = scmp.eq.s32.totalorder %s30, 0
      %p113 = por %p111, %p112
      %p114 = scmp.ne.s32.totalorder %s106, %s108
      %p115 = scmp.eq.s32.totalorder %s35, 1
      %p116 = por %p114, %p115
      %p117 = scmp.ne.s32.totalorder %s108, %s109
      %p118 = scmp.eq.s32.totalorder %s35, 0
      %p119 = por %p117, %p118
      %p120 = scmp.ne.s32.totalorder %s108, %s109
      %p121 = scmp.eq.s32.totalorder %s36, 1
      %p122 = por %p120, %p121
      %p124 = scmp.ne.s32.totalorder %s109, %s123
      %p125 = scmp.eq.s32.totalorder %s36, 0
      %p126 = por %p124, %p125
      %s128 = sadd.s32 %s127, 1
      %p131 = scmp.eq.s32.totalorder %s30, 1
      %p132 = scmp.ne.s32.totalorder %s127, %s129
      %p133 = scmp.eq.s32.totalorder %s30, 0
      %p134 = por %p132, %p133
      %p135 = scmp.ne.s32.totalorder %s127, %s129
      %p136 = scmp.eq.s32.totalorder %s35, 1
      %p137 = por %p135, %p136
      %p138 = scmp.ne.s32.totalorder %s129, %s130
      %p139 = scmp.eq.s32.totalorder %s35, 0
      %p140 = por %p138, %p139
      %p141 = scmp.ne.s32.totalorder %s129, %s130
      %p142 = scmp.eq.s32.totalorder %s36, 1
      %p143 = por %p141, %p142
      %p145 = scmp.ne.s32.totalorder %s130, %s144
      %p146 = scmp.eq.s32.totalorder %s36, 0
      %p147 = por %p145, %p146
      %s149 = sadd.s32 %s148, 1
      %p152 = scmp.eq.s32.totalorder %s30, 1
      %p153 = scmp.ne.s32.totalorder %s148, %s150
      %p154 = scmp.eq.s32.totalorder %s30, 0
      %p155 = por %p153, %p154
      %p156 = scmp.ne.s32.totalorder %s148, %s150
      %p157 = scmp.eq.s32.totalorder %s35, 1
      %p158 = por %p156, %p157
      %p159 = scmp.ne.s32.totalorder %s150, %s151
      %p160 = scmp.eq.s32.totalorder %s35, 0
      %p161 = por %p159, %p160
      %p162 = scmp.ne.s32.totalorder %s150, %s151
      %p163 = scmp.eq.s32.totalorder %s36, 1
      %p164 = por %p162, %p163
      %p166 = scmp.ne.s32.totalorder %s151, %s165
      %p167 = scmp.eq.s32.totalorder %s36, 0
      %p168 = por %p166, %p167
      %s170 = sadd.s32 %s169, 1
      %p173 = scmp.eq.s32.totalorder %s30, 1
      %p174 = scmp.ne.s32.totalorder %s169, %s171
      %p175 = scmp.eq.s32.totalorder %s30, 0
      %p176 = por %p174, %p175
      %p177 = scmp.ne.s32.totalorder %s169, %s171
      %p178 = scmp.eq.s32.totalorder %s35, 1
      %p179 = por %p177, %p178
      %p180 = scmp.ne.s32.totalorder %s171, %s172
      %p181 = scmp.eq.s32.totalorder %s35, 0
      %p182 = por %p180, %p181
      %p183 = scmp.ne.s32.totalorder %s171, %s172
      %p184 = scmp.eq.s32.totalorder %s36, 1
      %p185 = por %p183, %p184
      %p187 = scmp.ne.s32.totalorder %s172, %s186
      %p188 = scmp.eq.s32.totalorder %s36, 0
      %p189 = por %p187, %p188
      %s191 = sadd.s32 %s190, 1
      %p194 = scmp.eq.s32.totalorder %s30, 1
      %p195 = scmp.ne.s32.totalorder %s190, %s192
      %p196 = scmp.eq.s32.totalorder %s30, 0
      %p197 = por %p195, %p196
      %p198 = scmp.ne.s32.totalorder %s190, %s192
      %p199 = scmp.eq.s32.totalorder %s35, 1
      %p200 = por %p198, %p199
      %p201 = scmp.ne.s32.totalorder %s192, %s193
      %p202 = scmp.eq.s32.totalorder %s35, 0
      %p203 = por %p201, %p202
      %p204 = scmp.ne.s32.totalorder %s192, %s193
      %p205 = scmp.eq.s32.totalorder %s36, 1
      %p206 = por %p204, %p205
      %p208 = scmp.ne.s32.totalorder %s193, %s207
      %p209 = scmp.eq.s32.totalorder %s36, 0
      %p210 = por %p208, %p209
      %s212 = sadd.s32 %s211, 1
      %p215 = scmp.eq.s32.totalorder %s30, 1
      %p216 = scmp.ne.s32.totalorder %s211, %s213
      %p217 = scmp.eq.s32.totalorder %s30, 0
      %p218 = por %p216, %p217
      %p219 = scmp.ne.s32.totalorder %s211, %s213
      %p220 = scmp.eq.s32.totalorder %s35, 1
      %p221 = por %p219, %p220
      %p222 = scmp.ne.s32.totalorder %s213, %s214
      %p223 = scmp.eq.s32.totalorder %s35, 0
      %p224 = por %p222, %p223
      %p225 = scmp.ne.s32.totalorder %s213, %s214
      %p226 = scmp.eq.s32.totalorder %s36, 1
      %p227 = por %p225, %p226
      %p229 = scmp.ne.s32.totalorder %s214, %s228
      %p230 = scmp.eq.s32.totalorder %s36, 0
      %p231 = por %p229, %p230
      %s232 = ssub.s32 %s30, %s37
      %p233 = scmp.eq.s32.totalorder %s232, 0
      %s235 = sadd.s32 %s234, 1
      %s236 = scalar_select %p233, %s234, %s235
      %p239 = pneg %p233
      %p240 = scmp.eq.s32.totalorder %s30, 1
      %p241 = por %p239, %p240
      %p242 = scmp.ne.s32.totalorder %s234, %s237
      %p243 = scmp.eq.s32.totalorder %s30, 0
      %p244 = por %p242, %p243
      %p245 = scmp.ne.s32.totalorder %s234, %s237
      %p246 = scmp.eq.s32.totalorder %s35, 1
      %p247 = por %p245, %p246
      %p248 = scmp.ne.s32.totalorder %s237, %s238
      %p249 = scmp.eq.s32.totalorder %s35, 0
      %p250 = por %p248, %p249
      %p251 = scmp.ne.s32.totalorder %s237, %s238
      %p252 = scmp.eq.s32.totalorder %s36, 1
      %p253 = por %p251, %p252
      %p255 = scmp.ne.s32.totalorder %s238, %s254
      %p256 = scmp.eq.s32.totalorder %s36, 0
      %p257 = por %p255, %p256
      %s258 = ssub.s32 %s30, %s37
      %p259 = scmp.eq.s32.totalorder %s258, 0
      %s261 = sadd.s32 %s260, 1
      %s262 = scalar_select %p259, %s260, %s261
      %p265 = pneg %p259
      %p266 = scmp.eq.s32.totalorder %s30, 1
      %p267 = por %p265, %p266
      %p268 = scmp.ne.s32.totalorder %s260, %s263
      %p269 = scmp.eq.s32.totalorder %s30, 0
      %p270 = por %p268, %p269
      %p271 = scmp.ne.s32.totalorder %s260, %s263
      %p272 = scmp.eq.s32.totalorder %s35, 1
      %p273 = por %p271, %p272
      %p274 = scmp.ne.s32.totalorder %s263, %s264
      %p275 = scmp.eq.s32.totalorder %s35, 0
      %p276 = por %p274, %p275
      %p277 = scmp.ne.s32.totalorder %s263, %s264
      %p278 = scmp.eq.s32.totalorder %s36, 1
      %p279 = por %p277, %p278
      %p281 = scmp.ne.s32.totalorder %s264, %s280
      %p282 = scmp.eq.s32.totalorder %s36, 0
      %p283 = por %p281, %p282
      %s284 = ssub.s32 %s30, %s37
      %p285 = scmp.eq.s32.totalorder %s284, 0
      %s287 = sadd.s32 %s286, 1
      %s288 = scalar_select %p285, %s286, %s287
      %p291 = pneg %p285
      %p292 = scmp.eq.s32.totalorder %s30, 1
      %p293 = por %p291, %p292
      %p294 = scmp.ne.s32.totalorder %s286, %s289
      %p295 = scmp.eq.s32.totalorder %s30, 0
      %p296 = por %p294, %p295
      %p297 = scmp.ne.s32.totalorder %s286, %s289
      %p298 = scmp.eq.s32.totalorder %s35, 1
      %p299 = por %p297, %p298
      %p300 = scmp.ne.s32.totalorder %s289, %s290
      %p301 = scmp.eq.s32.totalorder %s35, 0
      %p302 = por %p300, %p301
      %p303 = scmp.ne.s32.totalorder %s289, %s290
      %p304 = scmp.eq.s32.totalorder %s36, 1
      %p305 = por %p303, %p304
      %p307 = scmp.ne.s32.totalorder %s290, %s306
      %p308 = scmp.eq.s32.totalorder %s36, 0
      %p309 = por %p307, %p308
      %p310 = scmp.le.s32.totalorder 1, %s30
      %p311 = scmp.lt.s32.totalorder %s30, 3
      %p312 = pnand %p310, %p311
      %p313 = pneg %p312
      // Predicated region
      $region9: #{tpu_custom_call.1} parent=5 // pred_check
        _
      $region10: #{tpu_custom_call.1} parent=5 // pred_check_branch
        %315 = sbr.rel (%p312) target = $region12
      $region11: #{tpu_custom_call.1} parent=5 // pred_region
        %s316 = ssub.s32 %s30, 1
        // Predicated region
        $region13: #{tpu_custom_call.1} parent=11 // pred_check
          %p317 = pneg %p77
        $region14: #{tpu_custom_call.1} parent=11 // pred_check_branch
          %319 = sbr.rel (%p317) target = $region16
        $region15: #{tpu_custom_call.1} parent=11 // pred_region
          %321 = vsyncadd [#allocation8], 0
          %s322 = sshll.u32 %s1, 4
          %s323 = int_to_ptr.hbm [resolvable:$true] %s322
          %s324 = sshll.u32 [#allocation7], 4
          %s325 = int_to_ptr.vmem [resolvable:$true] %s324
          %330 = dma.hbm_to_vmem [thread:$0]  %s323, 1024, %s325, [#allocation8], 256, 256, 16
        $region16: #{tpu_custom_call.1} parent=11 // pred_fallthru
          _
        // Predicated region
        $region17: #{tpu_custom_call.1} parent=11 // pred_check
          %p331 = pneg %p98
        $region18: #{tpu_custom_call.1} parent=11 // pred_check_branch
          %333 = sbr.rel (%p331) target = $region20
        $region19: #{tpu_custom_call.1} parent=11 // pred_region
          _
        $region20: #{tpu_custom_call.1} parent=11 // pred_fallthru
          _
        // Predicated region
        $region21: #{tpu_custom_call.1} parent=11 // pred_check
          %p334 = pneg %p119
        $region22: #{tpu_custom_call.1} parent=11 // pred_check_branch
          %336 = sbr.rel (%p334) target = $region24
        $region23: #{tpu_custom_call.1} parent=11 // pred_region
          %338 = vsyncadd [#allocation8], 0
          %s339 = sshll.u32 %s3, 4
          %s340 = int_to_ptr.hbm [resolvable:$true] %s339
          %s341 = sshll.u32 [#allocation9], 4
          %s342 = int_to_ptr.vmem [resolvable:$true] %s341
          %347 = dma.hbm_to_vmem [thread:$0]  %s340, 4096, %s342, [#allocation8], 64, 64, 4
        $region24: #{tpu_custom_call.1} parent=11 // pred_fallthru
          _
        // Predicated region
        $region25: #{tpu_custom_call.1} parent=11 // pred_check
          %p348 = pneg %p140
        $region26: #{tpu_custom_call.1} parent=11 // pred_check_branch
          %350 = sbr.rel (%p348) target = $region28
        $region27: #{tpu_custom_call.1} parent=11 // pred_region
          %352 = vsyncadd [#allocation11], 0
          %s354 = sshll.u32 %s4, 4
          %s355 = int_to_ptr.hbm [resolvable:$true] %s354
          %s356 = sshll.u32 [#allocation10], 4
          %s357 = int_to_ptr.vmem [resolvable:$true] %s356
          %359 = dma.hbm_to_vmem [thread:$0]  %s355, 16, %s357, [#allocation11]
        $region28: #{tpu_custom_call.1} parent=11 // pred_fallthru
          _
        // Predicated region
        $region29: #{tpu_custom_call.1} parent=11 // pred_check
          %p360 = pneg %p161
        $region30: #{tpu_custom_call.1} parent=11 // pred_check_branch
          %362 = sbr.rel (%p360) target = $region32
        $region31: #{tpu_custom_call.1} parent=11 // pred_region
          %364 = vsyncadd [#allocation11], 0
          %s366 = sshll.u32 %s5, 4
          %s367 = int_to_ptr.hbm [resolvable:$true] %s366
          %s368 = sshll.u32 [#allocation12], 4
          %s369 = int_to_ptr.vmem [resolvable:$true] %s368
          %371 = dma.hbm_to_vmem [thread:$0]  %s367, 16, %s369, [#allocation11]
        $region32: #{tpu_custom_call.1} parent=11 // pred_fallthru
          _
        // Predicated region
        $region33: #{tpu_custom_call.1} parent=11 // pred_check
          %p372 = pneg %p182
        $region34: #{tpu_custom_call.1} parent=11 // pred_check_branch
          %374 = sbr.rel (%p372) target = $region36
        $region35: #{tpu_custom_call.1} parent=11 // pred_region
          _
        $region36: #{tpu_custom_call.1} parent=11 // pred_fallthru
          _
        // Predicated region
        $region37: #{tpu_custom_call.1} parent=11 // pred_check
          %p375 = pneg %p203
        $region38: #{tpu_custom_call.1} parent=11 // pred_check_branch
          %377 = sbr.rel (%p375) target = $region40
        $region39: #{tpu_custom_call.1} parent=11 // pred_region
          _
        $region40: #{tpu_custom_call.1} parent=11 // pred_fallthru
          _
        // Predicated region
        $region41: #{tpu_custom_call.1} parent=11 // pred_check
          %p378 = pneg %p224
        $region42: #{tpu_custom_call.1} parent=11 // pred_check_branch
          %380 = sbr.rel (%p378) target = $region44
        $region43: #{tpu_custom_call.1} parent=11 // pred_region
          _
        $region44: #{tpu_custom_call.1} parent=11 // pred_fallthru
          _
      $region12: #{tpu_custom_call.1} parent=5 // pred_fallthru
        _
      %p381 = scmp.lt.s32.totalorder %s30, 2
      // Predicated region
      $region45: #{tpu_custom_call.1} parent=5 // pred_check
        %p382 = pneg %p381
      $region46: #{tpu_custom_call.1} parent=5 // pred_check_branch
        %384 = sbr.rel (%p382) target = $region48
      $region47: #{tpu_custom_call.1} parent=5 // pred_region
        // Predicated region
        $region49: #{tpu_custom_call.1} parent=47 // pred_check
          %p385 = pneg %p50
        $region50: #{tpu_custom_call.1} parent=47 // pred_check_branch
          %387 = sbr.rel (%p385) target = $region52
        $region51: #{tpu_custom_call.1} parent=47 // pred_region
          %s388 = sand.u32 %s40, 1
          %s389 = scalar_lea.sflag [#allocation5], %s388
          %s390 = sand.u32 %s40, 1
          %s391 = smul.addr %s390, 32
          %s392 = scalar_lea.vmem [#allocation4], %s391
          %s393 = smul.u32 4, %s30
          %395 = vsyncadd %s389, 0
          %s396 = smul.addr %s393, 8
          %s397 = scalar_lea.hbm %s0, %s396
          %s398 = sshll.u32 %s397, 4
          %s399 = int_to_ptr.hbm [resolvable:$true] %s398
          %s400 = sshll.u32 %s392, 4
          %s401 = int_to_ptr.vmem [resolvable:$true] %s400
          %406 = dma.hbm_to_vmem [thread:$0]  %s399, 512, %s401, %s389, 128, 128, 8
        $region52: #{tpu_custom_call.1} parent=47 // pred_fallthru
          _
      $region48: #{tpu_custom_call.1} parent=5 // pred_fallthru
        _
      %p407 = scmp.le.s32.totalorder 1, %s30
      %p408 = scmp.lt.s32.totalorder %s30, 3
      %p409 = pnand %p407, %p408
      %p410 = pneg %p409
      // Predicated region
      $region53: #{tpu_custom_call.1} parent=5 // pred_check
        _
      $region54: #{tpu_custom_call.1} parent=5 // pred_check_branch
        %412 = sbr.rel (%p409) target = $region56
      $region55: #{tpu_custom_call.1} parent=5 // pred_region
        %s413 = ssub.s32 %s30, 1
        %s414 = sand.u32 %s43, 1
        %s415 = scalar_lea.sflag [#allocation5], %s414
        %s416 = sand.u32 %s43, 1
        %s417 = smul.addr %s416, 32
        %s418 = scalar_lea.vmem [#allocation4], %s417
        // Predicated region
        $region57: #{tpu_custom_call.1} parent=55 // pred_check
          %p419 = pneg %p56
        $region58: #{tpu_custom_call.1} parent=55 // pred_check_branch
          %421 = sbr.rel (%p419) target = $region60
        $region59: #{tpu_custom_call.1} parent=55 // pred_region
          %423 = dma.done %s415, 512
        $region60: #{tpu_custom_call.1} parent=55 // pred_fallthru
          _
        // Predicated region
        $region61: #{tpu_custom_call.1} parent=55 // pred_check
          %p424 = pneg %p77
        $region62: #{tpu_custom_call.1} parent=55 // pred_check_branch
          %426 = sbr.rel (%p424) target = $region64
        $region63: #{tpu_custom_call.1} parent=55 // pred_region
          %428 = dma.done [#allocation8], 1024
        $region64: #{tpu_custom_call.1} parent=55 // pred_fallthru
          _
        // Predicated region
        $region65: #{tpu_custom_call.1} parent=55 // pred_check
          %p429 = pneg %p119
        $region66: #{tpu_custom_call.1} parent=55 // pred_check_branch
          %431 = sbr.rel (%p429) target = $region68
        $region67: #{tpu_custom_call.1} parent=55 // pred_region
          %433 = dma.done [#allocation8], 4096
        $region68: #{tpu_custom_call.1} parent=55 // pred_fallthru
          _
        // Predicated region
        $region69: #{tpu_custom_call.1} parent=55 // pred_check
          %p434 = pneg %p140
        $region70: #{tpu_custom_call.1} parent=55 // pred_check_branch
          %436 = sbr.rel (%p434) target = $region72
        $region71: #{tpu_custom_call.1} parent=55 // pred_region
          %438 = dma.done [#allocation11], 16
        $region72: #{tpu_custom_call.1} parent=55 // pred_fallthru
          _
        // Predicated region
        $region73: #{tpu_custom_call.1} parent=55 // pred_check
          %p439 = pneg %p161
        $region74: #{tpu_custom_call.1} parent=55 // pred_check_branch
          %441 = sbr.rel (%p439) target = $region76
        $region75: #{tpu_custom_call.1} parent=55 // pred_region
          %443 = dma.done [#allocation11], 16
        $region76: #{tpu_custom_call.1} parent=55 // pred_fallthru
          _
        %s444 = sand.u32 %s43, 1
        %s445 = scalar_lea.sflag [#allocation5], %s444
        %s446 = sand.u32 %s43, 1
        %s447 = smul.addr %s446, 32
        %s448 = scalar_lea.vmem [#allocation4], %s447
        %p449 = pneg %p56
        %p450 = pneg %p53
        %p451 = pneg %p77
        %p452 = pneg %p74
        %p453 = pneg %p98
        %p454 = pneg %p95
        %p455 = pneg %p119
        %p456 = pneg %p116
        %p457 = pneg %p140
        %p458 = pneg %p137
        %p459 = pneg %p161
        %p460 = pneg %p158
        %p461 = pneg %p182
        %p462 = pneg %p179
        %p463 = pneg %p203
        %p464 = pneg %p200
        %p465 = pneg %p224
        %p466 = pneg %p221
        %p467 = pneg %p250
        %p468 = pneg %p247
        %p469 = scmp.lt.s32.totalorder %s35, 1
        %s470 = scalar_select %p469, %s35, 1
        %s471 = smul.addr %s470, 4
        %s472 = scalar_lea.vmem %s9, %s471
        %p473 = pneg %p276
        %p474 = pneg %p273
        %p475 = scmp.lt.s32.totalorder %s35, 1
        %s476 = scalar_select %p475, %s35, 1
        %s477 = smul.addr %s476, 4
        %s478 = scalar_lea.vmem %s10, %s477
        %p479 = pneg %p302
        %p480 = pneg %p299
        %s481 = sand.u32 %s289, 1
        %s482 = scalar_lea.sflag [#allocation6], %s481
        %s483 = sand.u32 %s289, 1
        %s484 = smul.addr %s483, 4
        %s485 = scalar_lea.vmem [#allocation13], %s484
        %s486 = smul.u32 4, %s35
        %p487 = scmp.lt.s32.totalorder %s35, 1
        %s488 = scalar_select %p487, %s35, 1
        %s489 = smul.addr %s488, 4
        %s490 = scalar_lea.vmem %s9, %s489
        %p491 = scmp.lt.s32.totalorder %s35, 1
        %s492 = scalar_select %p491, %s35, 1
        %s493 = smul.addr %s492, 4
        %s494 = scalar_lea.vmem %s10, %s493
        %v496 = vld [vmem:[%s418] sm:$0xff]
        %v497 = vld [vmem:[%s418 + $0x8] sm:$0xff]
        %v498 = vld [vmem:[%s418 + $0x10] sm:$0xff]
        %v499 = vld [vmem:[%s418 + $0x18] sm:$0xff]
        %v500 = vpack.c.bf16 %v497, %v496
        %v501 = vpack.c.bf16 %v499, %v498
        %v502 = vld [vmem:[#allocation7] sm:$0xff]
        %v503 = vld [vmem:[#allocation7 + $0x8] sm:$0xff]
        %v504 = vld [vmem:[#allocation7 + $0x10] sm:$0xff]
        %v505 = vld [vmem:[#allocation7 + $0x18] sm:$0xff]
        %v506 = vld [vmem:[#allocation7 + $0x20] sm:$0xff]
        %v507 = vld [vmem:[#allocation7 + $0x28] sm:$0xff]
        %v508 = vld [vmem:[#allocation7 + $0x30] sm:$0xff]
        %v509 = vld [vmem:[#allocation7 + $0x38] sm:$0xff]
        %v510 = vld [vmem:[%s2] sm:$0xf]
        %v512 = vperm.slane %v510, 0
        %v513 = vperm.slane %v510, 1
        %v514 = vperm.slane %v510, 2
        %v515 = vperm.slane %v510, 3
        %v528 = vunpack.c.l.b16 %v502
        %v529 = vunpack.c.h.b16 %v502
        %v530 = vunpack.c.l.b16 %v503
        %v531 = vunpack.c.h.b16 %v503
        %v532 = vunpack.c.l.b16 %v504
        %v533 = vunpack.c.h.b16 %v504
        %v534 = vunpack.c.l.b16 %v505
        %v535 = vunpack.c.h.b16 %v505
        %v536 = vunpack.c.l.b16 %v506
        %v537 = vunpack.c.h.b16 %v506
        %v538 = vunpack.c.l.b16 %v507
        %v539 = vunpack.c.h.b16 %v507
        %v540 = vunpack.c.l.b16 %v508
        %v541 = vunpack.c.h.b16 %v508
        %v542 = vunpack.c.l.b16 %v509
        %v543 = vunpack.c.h.b16 %v509
        %v544 = vpack.c.b16 %v532, %v528
        %v545 = vpack.c.b16 %v533, %v529
        %v546 = vpack.c.b16 %v534, %v530
        %v547 = vpack.c.b16 %v535, %v531
        %v548 = vpack.c.b16 %v540, %v536
        %v549 = vpack.c.b16 %v541, %v537
        %v550 = vpack.c.b16 %v542, %v538
        %v551 = vpack.c.b16 %v543, %v539
        %vm560 = vcmask 261120
        %v562 = vsel %vm560, %v500, 0
        %v565 = vsel %vm560, %v501, 0
        %567 = vmatpush.bf16.msra.mxu0 0
        %568 = vmatpush.bf16.msra.mxu0 0
        %569 = vmatpush.bf16.msra.mxu0 0
        %570 = vmatpush.bf16.msra.mxu0 0
        %571 = vmatpush.bf16.msra.mxu0 0
        %572 = vmatpush.bf16.msra.mxu0 0
        %573 = vmatpush.bf16.msra.mxu0 %v548
        %574 = vmatpush.bf16.msra.mxu0 %v544
        %575 = vmatmul.bf16.gmra.mxu0 %v562
        %v576 = vpop.f32.mrf.mxu0
        %v577 = vadd.f32 %v512, %v576
        %v578 = vpop.f32.mrf.mxu0
        %v579 = vadd.f32 %v512, %v578
        %580 = vmatmul.bf16.gmra.mxu0 %v565
        %v581 = vpop.f32.mrf.mxu0
        %v582 = vadd.f32 %v512, %v581
        %v583 = vpop.f32.mrf.mxu0
        %v584 = vadd.f32 %v512, %v583
        %585 = vdwg.mxu0
        %586 = vmatpush.bf16.msra.mxu0 0
        %587 = vmatpush.bf16.msra.mxu0 0
        %588 = vmatpush.bf16.msra.mxu0 0
        %589 = vmatpush.bf16.msra.mxu0 0
        %590 = vmatpush.bf16.msra.mxu0 0
        %591 = vmatpush.bf16.msra.mxu0 0
        %592 = vmatpush.bf16.msra.mxu0 %v549
        %593 = vmatpush.bf16.msra.mxu0 %v545
        %594 = vmatmul.bf16.gmra.mxu0 %v562
        %v595 = vpop.f32.mrf.mxu0
        %v596 = vadd.f32 %v513, %v595
        %v597 = vpop.f32.mrf.mxu0
        %v598 = vadd.f32 %v513, %v597
        %599 = vmatmul.bf16.gmra.mxu0 %v565
        %v600 = vpop.f32.mrf.mxu0
        %v601 = vadd.f32 %v513, %v600
        %v602 = vpop.f32.mrf.mxu0
        %v603 = vadd.f32 %v513, %v602
        %604 = vdwg.mxu0
        %605 = vmatpush.bf16.msra.mxu0 0
        %606 = vmatpush.bf16.msra.mxu0 0
        %607 = vmatpush.bf16.msra.mxu0 0
        %608 = vmatpush.bf16.msra.mxu0 0
        %609 = vmatpush.bf16.msra.mxu0 0
        %610 = vmatpush.bf16.msra.mxu0 0
        %611 = vmatpush.bf16.msra.mxu0 %v550
        %612 = vmatpush.bf16.msra.mxu0 %v546
        %613 = vmatmul.bf16.gmra.mxu0 %v562
        %v614 = vpop.f32.mrf.mxu0
        %v615 = vadd.f32 %v514, %v614
        %v616 = vpop.f32.mrf.mxu0
        %v617 = vadd.f32 %v514, %v616
        %618 = vmatmul.bf16.gmra.mxu0 %v565
        %v619 = vpop.f32.mrf.mxu0
        %v620 = vadd.f32 %v514, %v619
        %v621 = vpop.f32.mrf.mxu0
        %v622 = vadd.f32 %v514, %v621
        %623 = vdwg.mxu0
        %624 = vmatpush.bf16.msra.mxu0 0
        %625 = vmatpush.bf16.msra.mxu0 0
        %626 = vmatpush.bf16.msra.mxu0 0
        %627 = vmatpush.bf16.msra.mxu0 0
        %628 = vmatpush.bf16.msra.mxu0 0
        %629 = vmatpush.bf16.msra.mxu0 0
        %630 = vmatpush.bf16.msra.mxu0 %v551
        %631 = vmatpush.bf16.msra.mxu0 %v547
        %632 = vmatmul.bf16.gmra.mxu0 %v562
        %v633 = vpop.f32.mrf.mxu0
        %v634 = vadd.f32 %v515, %v633
        %v635 = vpop.f32.mrf.mxu0
        %v636 = vadd.f32 %v515, %v635
        %637 = vmatmul.bf16.gmra.mxu0 %v565
        %v638 = vpop.f32.mrf.mxu0
        %v639 = vadd.f32 %v515, %v638
        %v640 = vpop.f32.mrf.mxu0
        %v641 = vadd.f32 %v515, %v640
        %642 = vdwg.mxu0
        %v643 = vmax.f32 %v577, 0.0
        %v644 = vmax.f32 %v596, 0.0
        %v645 = vmax.f32 %v615, 0.0
        %v646 = vmax.f32 %v634, 0.0
        %v647 = vmax.f32 %v579, 0.0
        %v648 = vmax.f32 %v598, 0.0
        %v649 = vmax.f32 %v617, 0.0
        %v650 = vmax.f32 %v636, 0.0
        %v651 = vmax.f32 %v582, 0.0
        %v652 = vmax.f32 %v601, 0.0
        %v653 = vmax.f32 %v620, 0.0
        %v654 = vmax.f32 %v639, 0.0
        %v655 = vmax.f32 %v584, 0.0
        %v656 = vmax.f32 %v603, 0.0
        %v657 = vmax.f32 %v622, 0.0
        %v658 = vmax.f32 %v641, 0.0
        %v659 = vpack.c.bf16 %v647, %v643
        %v660 = vpack.c.bf16 %v648, %v644
        %v661 = vpack.c.bf16 %v649, %v645
        %v662 = vpack.c.bf16 %v650, %v646
        %v663 = vpack.c.bf16 %v655, %v651
        %v664 = vpack.c.bf16 %v656, %v652
        %v665 = vpack.c.bf16 %v657, %v653
        %v666 = vpack.c.bf16 %v658, %v654
        %v667 = vld [vmem:[#allocation9] sm:$0xf]
        %v668 = vld [vmem:[#allocation9 + $0x4] sm:$0xf]
        %v669 = vld [vmem:[#allocation9 + $0x8] sm:$0xf]
        %v670 = vld [vmem:[#allocation9 + $0xc] sm:$0xf]
        %v671 = vld [vmem:[#allocation9 + $0x10] sm:$0xf]
        %v672 = vld [vmem:[#allocation9 + $0x14] sm:$0xf]
        %v673 = vld [vmem:[#allocation9 + $0x18] sm:$0xf]
        %v674 = vld [vmem:[#allocation9 + $0x1c] sm:$0xf]
        %v675 = vld [vmem:[#allocation9 + $0x20] sm:$0xf]
        %v676 = vld [vmem:[#allocation9 + $0x24] sm:$0xf]
        %v677 = vld [vmem:[#allocation9 + $0x28] sm:$0xf]
        %v678 = vld [vmem:[#allocation9 + $0x2c] sm:$0xf]
        %v679 = vld [vmem:[#allocation9 + $0x30] sm:$0xf]
        %v680 = vld [vmem:[#allocation9 + $0x34] sm:$0xf]
        %v681 = vld [vmem:[#allocation9 + $0x38] sm:$0xf]
        %v682 = vld [vmem:[#allocation9 + $0x3c] sm:$0xf]
        %v683 = vld [vmem:[#allocation9 + $0x40] sm:$0xf]
        %v684 = vld [vmem:[#allocation9 + $0x44] sm:$0xf]
        %v685 = vld [vmem:[#allocation9 + $0x48] sm:$0xf]
        %v686 = vld [vmem:[#allocation9 + $0x4c] sm:$0xf]
        %v687 = vld [vmem:[#allocation9 + $0x50] sm:$0xf]
        %v688 = vld [vmem:[#allocation9 + $0x54] sm:$0xf]
        %v689 = vld [vmem:[#allocation9 + $0x58] sm:$0xf]
        %v690 = vld [vmem:[#allocation9 + $0x5c] sm:$0xf]
        %v691 = vld [vmem:[#allocation9 + $0x60] sm:$0xf]
        %v692 = vld [vmem:[#allocation9 + $0x64] sm:$0xf]
        %v693 = vld [vmem:[#allocation9 + $0x68] sm:$0xf]
        %v694 = vld [vmem:[#allocation9 + $0x6c] sm:$0xf]
        %v695 = vld [vmem:[#allocation9 + $0x70] sm:$0xf]
        %v696 = vld [vmem:[#allocation9 + $0x74] sm:$0xf]
        %v697 = vld [vmem:[#allocation9 + $0x78] sm:$0xf]
        %v698 = vld [vmem:[#allocation9 + $0x7c] sm:$0xf]
        %v699 = vld [vmem:[#allocation9 + $0x80] sm:$0xf]
        %v700 = vld [vmem:[#allocation9 + $0x84] sm:$0xf]
        %v701 = vld [vmem:[#allocation9 + $0x88] sm:$0xf]
        %v702 = vld [vmem:[#allocation9 + $0x8c] sm:$0xf]
        %v703 = vld [vmem:[#allocation9 + $0x90] sm:$0xf]
        %v704 = vld [vmem:[#allocation9 + $0x94] sm:$0xf]
        %v705 = vld [vmem:[#allocation9 + $0x98] sm:$0xf]
        %v706 = vld [vmem:[#allocation9 + $0x9c] sm:$0xf]
        %v707 = vld [vmem:[#allocation9 + $0xa0] sm:$0xf]
        %v708 = vld [vmem:[#allocation9 + $0xa4] sm:$0xf]
        %v709 = vld [vmem:[#allocation9 + $0xa8] sm:$0xf]
        %v710 = vld [vmem:[#allocation9 + $0xac] sm:$0xf]
        %v711 = vld [vmem:[#allocation9 + $0xb0] sm:$0xf]
        %v712 = vld [vmem:[#allocation9 + $0xb4] sm:$0xf]
        %v713 = vld [vmem:[#allocation9 + $0xb8] sm:$0xf]
        %v714 = vld [vmem:[#allocation9 + $0xbc] sm:$0xf]
        %v715 = vld [vmem:[#allocation9 + $0xc0] sm:$0xf]
        %v716 = vld [vmem:[#allocation9 + $0xc4] sm:$0xf]
        %v717 = vld [vmem:[#allocation9 + $0xc8] sm:$0xf]
        %v718 = vld [vmem:[#allocation9 + $0xcc] sm:$0xf]
        %v719 = vld [vmem:[#allocation9 + $0xd0] sm:$0xf]
        %v720 = vld [vmem:[#allocation9 + $0xd4] sm:$0xf]
        %v721 = vld [vmem:[#allocation9 + $0xd8] sm:$0xf]
        %v722 = vld [vmem:[#allocation9 + $0xdc] sm:$0xf]
        %v723 = vld [vmem:[#allocation9 + $0xe0] sm:$0xf]
        %v724 = vld [vmem:[#allocation9 + $0xe4] sm:$0xf]
        %v725 = vld [vmem:[#allocation9 + $0xe8] sm:$0xf]
        %v726 = vld [vmem:[#allocation9 + $0xec] sm:$0xf]
        %v727 = vld [vmem:[#allocation9 + $0xf0] sm:$0xf]
        %v728 = vld [vmem:[#allocation9 + $0xf4] sm:$0xf]
        %v729 = vld [vmem:[#allocation9 + $0xf8] sm:$0xf]
        %v730 = vld [vmem:[#allocation9 + $0xfc] sm:$0xf]
        %v731 = vld [vmem:[#allocation10] sm:$0x1]
        %v733 = vperm.slane %v731, 0
        %v799 = vunpack.c.l.b16 %v667
        %v800 = vunpack.c.l.b16 %v668
        %v801 = vunpack.c.l.b16 %v669
        %v802 = vunpack.c.l.b16 %v670
        %v803 = vunpack.c.l.b16 %v671
        %v804 = vunpack.c.l.b16 %v672
        %v805 = vunpack.c.l.b16 %v673
        %v806 = vunpack.c.l.b16 %v674
        %v807 = vunpack.c.l.b16 %v675
        %v808 = vunpack.c.l.b16 %v676
        %v809 = vunpack.c.l.b16 %v677
        %v810 = vunpack.c.l.b16 %v678
        %v811 = vunpack.c.l.b16 %v679
        %v812 = vunpack.c.l.b16 %v680
        %v813 = vunpack.c.l.b16 %v681
        %v814 = vunpack.c.l.b16 %v682
        %v815 = vunpack.c.l.b16 %v683
        %v816 = vunpack.c.l.b16 %v684
        %v817 = vunpack.c.l.b16 %v685
        %v818 = vunpack.c.l.b16 %v686
        %v819 = vunpack.c.l.b16 %v687
        %v820 = vunpack.c.l.b16 %v688
        %v821 = vunpack.c.l.b16 %v689
        %v822 = vunpack.c.l.b16 %v690
        %v823 = vunpack.c.l.b16 %v691
        %v824 = vunpack.c.l.b16 %v692
        %v825 = vunpack.c.l.b16 %v693
        %v826 = vunpack.c.l.b16 %v694
        %v827 = vunpack.c.l.b16 %v695
        %v828 = vunpack.c.l.b16 %v696
        %v829 = vunpack.c.l.b16 %v697
        %v830 = vunpack.c.l.b16 %v698
        %v831 = vunpack.c.l.b16 %v699
        %v832 = vunpack.c.l.b16 %v700
        %v833 = vunpack.c.l.b16 %v701
        %v834 = vunpack.c.l.b16 %v702
        %v835 = vunpack.c.l.b16 %v703
        %v836 = vunpack.c.l.b16 %v704
        %v837 = vunpack.c.l.b16 %v705
        %v838 = vunpack.c.l.b16 %v706
        %v839 = vunpack.c.l.b16 %v707
        %v840 = vunpack.c.l.b16 %v708
        %v841 = vunpack.c.l.b16 %v709
        %v842 = vunpack.c.l.b16 %v710
        %v843 = vunpack.c.l.b16 %v711
        %v844 = vunpack.c.l.b16 %v712
        %v845 = vunpack.c.l.b16 %v713
        %v846 = vunpack.c.l.b16 %v714
        %v847 = vunpack.c.l.b16 %v715
        %v848 = vunpack.c.l.b16 %v716
        %v849 = vunpack.c.l.b16 %v717
        %v850 = vunpack.c.l.b16 %v718
        %v851 = vunpack.c.l.b16 %v719
        %v852 = vunpack.c.l.b16 %v720
        %v853 = vunpack.c.l.b16 %v721
        %v854 = vunpack.c.l.b16 %v722
        %v855 = vunpack.c.l.b16 %v723
        %v856 = vunpack.c.l.b16 %v724
        %v857 = vunpack.c.l.b16 %v725
        %v858 = vunpack.c.l.b16 %v726
        %v859 = vunpack.c.l.b16 %v727
        %v860 = vunpack.c.l.b16 %v728
        %v861 = vunpack.c.l.b16 %v729
        %v862 = vunpack.c.l.b16 %v730
        %v863 = vpack.c.b16 %v800, %v799
        %v864 = vpack.c.b16 %v802, %v801
        %v865 = vpack.c.b16 %v804, %v803
        %v866 = vpack.c.b16 %v806, %v805
        %v867 = vpack.c.b16 %v808, %v807
        %v868 = vpack.c.b16 %v810, %v809
        %v869 = vpack.c.b16 %v812, %v811
        %v870 = vpack.c.b16 %v814, %v813
        %v871 = vpack.c.b16 %v816, %v815
        %v872 = vpack.c.b16 %v818, %v817
        %v873 = vpack.c.b16 %v820, %v819
        %v874 = vpack.c.b16 %v822, %v821
        %v875 = vpack.c.b16 %v824, %v823
        %v876 = vpack.c.b16 %v826, %v825
        %v877 = vpack.c.b16 %v828, %v827
        %v878 = vpack.c.b16 %v830, %v829
        %v879 = vpack.c.b16 %v832, %v831
        %v880 = vpack.c.b16 %v834, %v833
        %v881 = vpack.c.b16 %v836, %v835
        %v882 = vpack.c.b16 %v838, %v837
        %v883 = vpack.c.b16 %v840, %v839
        %v884 = vpack.c.b16 %v842, %v841
        %v885 = vpack.c.b16 %v844, %v843
        %v886 = vpack.c.b16 %v846, %v845
        %v887 = vpack.c.b16 %v848, %v847
        %v888 = vpack.c.b16 %v850, %v849
        %v889 = vpack.c.b16 %v852, %v851
        %v890 = vpack.c.b16 %v854, %v853
        %v891 = vpack.c.b16 %v856, %v855
        %v892 = vpack.c.b16 %v858, %v857
        %v893 = vpack.c.b16 %v860, %v859
        %v894 = vpack.c.b16 %v862, %v861
        %927 = vmatpush.bf16.msra.mxu0 %v870
        %928 = vmatpush.bf16.msra.mxu0 %v869
        %929 = vmatpush.bf16.msra.mxu0 %v868
        %930 = vmatpush.bf16.msra.mxu0 %v867
        %931 = vmatpush.bf16.msra.mxu0 %v866
        %932 = vmatpush.bf16.msra.mxu0 %v865
        %933 = vmatpush.bf16.msra.mxu0 %v864
        %934 = vmatpush.bf16.msra.mxu0 %v863
        %935 = vmatmul.bf16.gmra.mxu0 %v659
        %v936 = vpop.f32.mrf.mxu0
        %v937 = vadd.f32 %v733, %v936
        %v938 = vpop.f32.mrf.mxu0
        %v939 = vadd.f32 %v733, %v938
        %940 = vmatmul.bf16.gmra.mxu0 %v663
        %v941 = vpop.f32.mrf.mxu0
        %v942 = vadd.f32 %v733, %v941
        %v943 = vpop.f32.mrf.mxu0
        %v944 = vadd.f32 %v733, %v943
        %945 = vdwg.mxu0
        %946 = vmatpush.bf16.msra.mxu0 %v878
        %947 = vmatpush.bf16.msra.mxu0 %v877
        %948 = vmatpush.bf16.msra.mxu0 %v876
        %949 = vmatpush.bf16.msra.mxu0 %v875
        %950 = vmatpush.bf16.msra.mxu0 %v874
        %951 = vmatpush.bf16.msra.mxu0 %v873
        %952 = vmatpush.bf16.msra.mxu0 %v872
        %953 = vmatpush.bf16.msra.mxu0 %v871
        %954 = vmatmul.bf16.gmra.mxu0 %v660
        %v955 = vpop.f32.mrf.mxu0
        %v956 = vadd.f32 %v937, %v955
        %v957 = vpop.f32.mrf.mxu0
        %v958 = vadd.f32 %v939, %v957
        %959 = vmatmul.bf16.gmra.mxu0 %v664
        %v960 = vpop.f32.mrf.mxu0
        %v961 = vadd.f32 %v942, %v960
        %v962 = vpop.f32.mrf.mxu0
        %v963 = vadd.f32 %v944, %v962
        %964 = vdwg.mxu0
        %965 = vmatpush.bf16.msra.mxu0 %v886
        %966 = vmatpush.bf16.msra.mxu0 %v885
        %967 = vmatpush.bf16.msra.mxu0 %v884
        %968 = vmatpush.bf16.msra.mxu0 %v883
        %969 = vmatpush.bf16.msra.mxu0 %v882
        %970 = vmatpush.bf16.msra.mxu0 %v881
        %971 = vmatpush.bf16.msra.mxu0 %v880
        %972 = vmatpush.bf16.msra.mxu0 %v879
        %973 = vmatmul.bf16.gmra.mxu0 %v661
        %v974 = vpop.f32.mrf.mxu0
        %v975 = vadd.f32 %v956, %v974
        %v976 = vpop.f32.mrf.mxu0
        %v977 = vadd.f32 %v958, %v976
        %978 = vmatmul.bf16.gmra.mxu0 %v665
        %v979 = vpop.f32.mrf.mxu0
        %v980 = vadd.f32 %v961, %v979
        %v981 = vpop.f32.mrf.mxu0
        %v982 = vadd.f32 %v963, %v981
        %983 = vdwg.mxu0
        %984 = vmatpush.bf16.msra.mxu0 %v894
        %985 = vmatpush.bf16.msra.mxu0 %v893
        %986 = vmatpush.bf16.msra.mxu0 %v892
        %987 = vmatpush.bf16.msra.mxu0 %v891
        %988 = vmatpush.bf16.msra.mxu0 %v890
        %989 = vmatpush.bf16.msra.mxu0 %v889
        %990 = vmatpush.bf16.msra.mxu0 %v888
        %991 = vmatpush.bf16.msra.mxu0 %v887
        %992 = vmatmul.bf16.gmra.mxu0 %v662
        %v993 = vpop.f32.mrf.mxu0
        %v994 = vadd.f32 %v975, %v993
        %v995 = vpop.f32.mrf.mxu0
        %v996 = vadd.f32 %v977, %v995
        %997 = vmatmul.bf16.gmra.mxu0 %v666
        %v998 = vpop.f32.mrf.mxu0
        %v999 = vadd.f32 %v980, %v998
        %v1000 = vpop.f32.mrf.mxu0
        %v1001 = vadd.f32 %v982, %v1000
        %1002 = vdwg.mxu0
        %v1003 = vtanh.pop %v994
        %v1004 = vtanh.pop %v996
        %v1005 = vtanh.pop %v999
        %v1006 = vtanh.pop %v1001
        %v1007 = vld [vmem:[#allocation12] sm:$0x1]
        %v1009 = vperm.slane %v1007, 0
        %v1011 = vmul.f32 %v1003, %v1009
        %v1012 = vmul.f32 %v1004, %v1009
        %v1013 = vmul.f32 %v1005, %v1009
        %v1014 = vmul.f32 %v1006, %v1009
        %1015 = vadd.xlane.f32.xlu0 %v1011
        %v1016 = vpop.xlane.xlu0 %1015
        %1017 = vadd.xlane.f32.xlu0 %v1012
        %v1018 = vpop.xlane.xlu0 %1017
        %1019 = vadd.xlane.f32.xlu0 %v1013
        %v1020 = vpop.xlane.xlu0 %1019
        %1021 = vadd.xlane.f32.xlu0 %v1014
        %v1022 = vpop.xlane.xlu0 %1021
        %v1023 = vld [vmem:[#allocation2] sm:$0x1]
        %v1025 = vperm.slane %v1023, 0
        %1026 = vset.pattern.permute.xlu0 0
        %1027 = vperm.xlu0 %1026, %v1025
        %v1028 = vpop.permute.xlu0 %1027
        %v1030 = vadd.f32 %v1016, %v1028
        %v1031 = vadd.f32 %v1018, %v1028
        %v1032 = vadd.f32 %v1020, %v1028
        %v1033 = vadd.f32 %v1022, %v1028
        %v1038 = vlaneseq
        %v1039 = vand.u32 %v1038, 127
        %v1040 = vperm.slane %v1030, %v1039
        %v1041 = vperm.slane %v1031, %v1039
        %v1042 = vperm.slane %v1032, %v1039
        %v1043 = vperm.slane %v1033, %v1039
        %vm1044 = vcmask 1041409
        %v1045 = vsel %vm1044, %v1041, %v1040
        %vm1046 = vcmask 1042434
        %v1047 = vsel %vm1046, %v1042, %v1045
        %vm1048 = vcmask 1043459
        %v1049 = vsel %vm1048, %v1043, %v1047
        %vm1051 = vcmask 60416
        %v1052 = vsel %vm1051, %v1049, -inf
        %1053 = vmax.xlane.f32.xlu0 %v1052
        %v1054 = vpop.xlane.xlu0 %1053
        %v1056 = vperm.slane %v1054, 0
        %v1057 = vperm.slane %v1054, 1
        %v1058 = vperm.slane %v1054, 2
        %v1059 = vperm.slane %v1054, 3
        %v1064 = vsub.f32 %v1030, %v1056
        %v1065 = vsub.f32 %v1031, %v1057
        %v1066 = vsub.f32 %v1032, %v1058
        %v1067 = vsub.f32 %v1033, %v1059
        %v1068 = vmul.f32 %v1064, 1.442695
        %v1069 = vpow.pop %v1068
        %v1070 = vmul.f32 %v1065, 1.442695
        %v1071 = vpow.pop %v1070
        %v1072 = vmul.f32 %v1066, 1.442695
        %v1073 = vpow.pop %v1072
        %v1074 = vmul.f32 %v1067, 1.442695
        %v1075 = vpow.pop %v1074
        %1080 = vset.pattern.permute.xlu0 0
        %1081 = vperm.xlu0 %1080, %v1069
        %v1082 = vpop.permute.xlu0 %1081
        %1083 = vset.pattern.permute.xlu0 0
        %1084 = vperm.xlu0 %1083, %v1071
        %v1085 = vpop.permute.xlu0 %1084
        %1086 = vset.pattern.permute.xlu0 0
        %1087 = vperm.xlu0 %1086, %v1073
        %v1088 = vpop.permute.xlu0 %1087
        %1089 = vset.pattern.permute.xlu0 0
        %1090 = vperm.xlu0 %1089, %v1075
        %v1091 = vpop.permute.xlu0 %1090
        %v1092 = vperm.slane %v1082, %v1039
        %v1093 = vperm.slane %v1085, %v1039
        %v1094 = vperm.slane %v1088, %v1039
        %v1095 = vperm.slane %v1091, %v1039
        %v1096 = vsel %vm1044, %v1093, %v1092
        %v1097 = vsel %vm1046, %v1094, %v1096
        %v1098 = vsel %vm1048, %v1095, %v1097
        %v1100 = vsel %vm1051, %v1098, 0.0
        %1101 = vadd.xlane.f32.xlu0 %v1100
        %v1102 = vpop.xlane.xlu0 %1101
        %v1103 = vrcp.pop %v1102
        %v1105 = vperm.slane %v1103, 0
        %v1106 = vperm.slane %v1103, 1
        %v1107 = vperm.slane %v1103, 2
        %v1108 = vperm.slane %v1103, 3
        %v1113 = vmul.f32 %v1069, %v1105
        %v1114 = vmul.f32 %v1071, %v1106
        %v1115 = vmul.f32 %v1073, %v1107
        %v1116 = vmul.f32 %v1075, %v1108
        %1118 = vset.pattern.permute.xlu0 0
        %1119 = vperm.xlu0 %1118, %v1113
        %v1120 = vpop.permute.xlu0 %1119
        %1123 = vset.pattern.permute.xlu0 0
        %1124 = vperm.xlu0 %1123, %v1114
        %v1125 = vpop.permute.xlu0 %1124
        %1128 = vset.pattern.permute.xlu0 0
        %1129 = vperm.xlu0 %1128, %v1115
        %v1130 = vpop.permute.xlu0 %1129
        %1133 = vset.pattern.permute.xlu0 0
        %1134 = vperm.xlu0 %1133, %v1116
        %v1135 = vpop.permute.xlu0 %1134
        %v1137 = vmul.f32 %v643, %v1120
        %v1138 = vmul.f32 %v644, %v1120
        %v1139 = vmul.f32 %v645, %v1120
        %v1140 = vmul.f32 %v646, %v1120
        %v1141 = vmul.f32 %v647, %v1125
        %v1142 = vmul.f32 %v648, %v1125
        %v1143 = vmul.f32 %v649, %v1125
        %v1144 = vmul.f32 %v650, %v1125
        %v1145 = vmul.f32 %v651, %v1130
        %v1146 = vmul.f32 %v652, %v1130
        %v1147 = vmul.f32 %v653, %v1130
        %v1148 = vmul.f32 %v654, %v1130
        %v1149 = vmul.f32 %v655, %v1135
        %v1150 = vmul.f32 %v656, %v1135
        %v1151 = vmul.f32 %v657, %v1135
        %v1152 = vmul.f32 %v658, %v1135
        %v1153 = vrot.slane %v1137, 4
        %v1154 = vadd.f32 %v1137, %v1153
        %v1155 = vrot.slane %v1154, 2
        %v1156 = vadd.f32 %v1154, %v1155
        %v1157 = vrot.slane %v1156, 1
        %v1158 = vadd.f32 %v1156, %v1157
        %v1159 = vrot.slane %v1138, 4
        %v1160 = vadd.f32 %v1138, %v1159
        %v1161 = vrot.slane %v1160, 2
        %v1162 = vadd.f32 %v1160, %v1161
        %v1163 = vrot.slane %v1162, 1
        %v1164 = vadd.f32 %v1162, %v1163
        %v1165 = vrot.slane %v1139, 4
        %v1166 = vadd.f32 %v1139, %v1165
        %v1167 = vrot.slane %v1166, 2
        %v1168 = vadd.f32 %v1166, %v1167
        %v1169 = vrot.slane %v1168, 1
        %v1170 = vadd.f32 %v1168, %v1169
        %v1171 = vrot.slane %v1140, 4
        %v1172 = vadd.f32 %v1140, %v1171
        %v1173 = vrot.slane %v1172, 2
        %v1174 = vadd.f32 %v1172, %v1173
        %v1175 = vrot.slane %v1174, 1
        %v1176 = vadd.f32 %v1174, %v1175
        %v1177 = vrot.slane %v1141, 4
        %v1178 = vadd.f32 %v1141, %v1177
        %v1179 = vrot.slane %v1178, 2
        %v1180 = vadd.f32 %v1178, %v1179
        %v1181 = vrot.slane %v1180, 1
        %v1182 = vadd.f32 %v1180, %v1181
        %v1183 = vrot.slane %v1142, 4
        %v1184 = vadd.f32 %v1142, %v1183
        %v1185 = vrot.slane %v1184, 2
        %v1186 = vadd.f32 %v1184, %v1185
        %v1187 = vrot.slane %v1186, 1
        %v1188 = vadd.f32 %v1186, %v1187
        %v1189 = vrot.slane %v1143, 4
        %v1190 = vadd.f32 %v1143, %v1189
        %v1191 = vrot.slane %v1190, 2
        %v1192 = vadd.f32 %v1190, %v1191
        %v1193 = vrot.slane %v1192, 1
        %v1194 = vadd.f32 %v1192, %v1193
        %v1195 = vrot.slane %v1144, 4
        %v1196 = vadd.f32 %v1144, %v1195
        %v1197 = vrot.slane %v1196, 2
        %v1198 = vadd.f32 %v1196, %v1197
        %v1199 = vrot.slane %v1198, 1
        %v1200 = vadd.f32 %v1198, %v1199
        %v1201 = vrot.slane %v1145, 4
        %v1202 = vadd.f32 %v1145, %v1201
        %v1203 = vrot.slane %v1202, 2
        %v1204 = vadd.f32 %v1202, %v1203
        %v1205 = vrot.slane %v1204, 1
        %v1206 = vadd.f32 %v1204, %v1205
        %v1207 = vrot.slane %v1146, 4
        %v1208 = vadd.f32 %v1146, %v1207
        %v1209 = vrot.slane %v1208, 2
        %v1210 = vadd.f32 %v1208, %v1209
        %v1211 = vrot.slane %v1210, 1
        %v1212 = vadd.f32 %v1210, %v1211
        %v1213 = vrot.slane %v1147, 4
        %v1214 = vadd.f32 %v1147, %v1213
        %v1215 = vrot.slane %v1214, 2
        %v1216 = vadd.f32 %v1214, %v1215
        %v1217 = vrot.slane %v1216, 1
        %v1218 = vadd.f32 %v1216, %v1217
        %v1219 = vrot.slane %v1148, 4
        %v1220 = vadd.f32 %v1148, %v1219
        %v1221 = vrot.slane %v1220, 2
        %v1222 = vadd.f32 %v1220, %v1221
        %v1223 = vrot.slane %v1222, 1
        %v1224 = vadd.f32 %v1222, %v1223
        %v1225 = vrot.slane %v1149, 4
        %v1226 = vadd.f32 %v1149, %v1225
        %v1227 = vrot.slane %v1226, 2
        %v1228 = vadd.f32 %v1226, %v1227
        %v1229 = vrot.slane %v1228, 1
        %v1230 = vadd.f32 %v1228, %v1229
        %v1231 = vrot.slane %v1150, 4
        %v1232 = vadd.f32 %v1150, %v1231
        %v1233 = vrot.slane %v1232, 2
        %v1234 = vadd.f32 %v1232, %v1233
        %v1235 = vrot.slane %v1234, 1
        %v1236 = vadd.f32 %v1234, %v1235
        %v1237 = vrot.slane %v1151, 4
        %v1238 = vadd.f32 %v1151, %v1237
        %v1239 = vrot.slane %v1238, 2
        %v1240 = vadd.f32 %v1238, %v1239
        %v1241 = vrot.slane %v1240, 1
        %v1242 = vadd.f32 %v1240, %v1241
        %v1243 = vrot.slane %v1152, 4
        %v1244 = vadd.f32 %v1152, %v1243
        %v1245 = vrot.slane %v1244, 2
        %v1246 = vadd.f32 %v1244, %v1245
        %v1247 = vrot.slane %v1246, 1
        %v1248 = vadd.f32 %v1246, %v1247
        %v1249 = vld [vmem:[%s7] sm:$0xf]
        %v1251 = vperm.slane %v1249, 0
        %v1252 = vperm.slane %v1249, 1
        %v1253 = vperm.slane %v1249, 2
        %v1254 = vperm.slane %v1249, 3
        %v1259 = vmul.f32 %v1158, %v1251
        %v1260 = vmul.f32 %v1164, %v1252
        %v1261 = vmul.f32 %v1170, %v1253
        %v1262 = vmul.f32 %v1176, %v1254
        %v1263 = vmul.f32 %v1182, %v1251
        %v1264 = vmul.f32 %v1188, %v1252
        %v1265 = vmul.f32 %v1194, %v1253
        %v1266 = vmul.f32 %v1200, %v1254
        %v1267 = vmul.f32 %v1206, %v1251
        %v1268 = vmul.f32 %v1212, %v1252
        %v1269 = vmul.f32 %v1218, %v1253
        %v1270 = vmul.f32 %v1224, %v1254
        %v1271 = vmul.f32 %v1230, %v1251
        %v1272 = vmul.f32 %v1236, %v1252
        %v1273 = vmul.f32 %v1242, %v1253
        %v1274 = vmul.f32 %v1248, %v1254
        %v1291 = vrot.slane %v1263, 7
        %v1292 = vsel %vm1044, %v1291, %v1259
        %v1293 = vrot.slane %v1267, 6
        %v1294 = vsel %vm1046, %v1293, %v1292
        %v1295 = vrot.slane %v1271, 5
        %v1296 = vsel %vm1048, %v1295, %v1294
        %v1297 = vrot.slane %v1264, 7
        %v1298 = vsel %vm1044, %v1297, %v1260
        %v1299 = vrot.slane %v1268, 6
        %v1300 = vsel %vm1046, %v1299, %v1298
        %v1301 = vrot.slane %v1272, 5
        %v1302 = vsel %vm1048, %v1301, %v1300
        %v1303 = vrot.slane %v1265, 7
        %v1304 = vsel %vm1044, %v1303, %v1261
        %v1305 = vrot.slane %v1269, 6
        %v1306 = vsel %vm1046, %v1305, %v1304
        %v1307 = vrot.slane %v1273, 5
        %v1308 = vsel %vm1048, %v1307, %v1306
        %v1309 = vrot.slane %v1266, 7
        %v1310 = vsel %vm1044, %v1309, %v1262
        %v1311 = vrot.slane %v1270, 6
        %v1312 = vsel %vm1046, %v1311, %v1310
        %v1313 = vrot.slane %v1274, 5
        %v1314 = vsel %vm1048, %v1313, %v1312
        %vm1319 = vcmask 1043456
        %v1320 = vsel %vm1319, %v1296, 0.0
        %v1321 = vsel %vm1319, %v1302, 0.0
        %v1322 = vadd.f32 %v1320, %v1321
        %v1323 = vsel %vm1319, %v1308, 0.0
        %v1324 = vadd.f32 %v1322, %v1323
        %v1325 = vsel %vm1319, %v1314, 0.0
        %v1326 = vadd.f32 %v1324, %v1325
        %1327 = vadd.xlane.f32.xlu0 %v1326
        %v1328 = vpop.xlane.xlu0 %1327
        %v1329 = vld [vmem:[#allocation3] sm:$0x1]
        %v1331 = vperm.slane %v1329, 0
        %v1333 = vadd.f32 %v1328, %v1331
        %v1334 = vmul.f32 %v1333, 0.5
        %v1335 = vtanh.pop %v1334
        %v1336 = vadd.f32 %v1335, 1.0
        %v1337 = vmul.f32 %v1336, 0.5
        %v1338 = vperm.slane %v1120, %v1039
        %v1339 = vperm.slane %v1125, %v1039
        %v1340 = vperm.slane %v1130, %v1039
        %v1341 = vperm.slane %v1135, %v1039
        %v1342 = vsel %vm1044, %v1339, %v1338
        %v1343 = vsel %vm1046, %v1340, %v1342
        %v1344 = vsel %vm1048, %v1341, %v1343
        %1346 = vst.msk [vmem:[%s485] sm:$0xf] %vm1051, %v1344
        %vm1347 = vcmask 3072
        %1348 = vst.msk [vmem:[%s490] sm:$0xf] %vm1347, %v1337
        %vm1349 = vcmp.ge.f32.partialorder %v1337, 0.5
        %v1350 = vsel %vm1349, 1, 0
        %v1351 = vcvt.s32.f32 %v1350
        %1352 = vst.msk [vmem:[%s494] sm:$0xf] %vm1347, %v1351
        %p1353 = scmp.lt.s32.totalorder %s35, 1
        %s1354 = scalar_select %p1353, %s35, 1
        %s1355 = smul.addr %s1354, 4
        %s1356 = scalar_lea.vmem %s9, %s1355
        %p1357 = scmp.lt.s32.totalorder %s35, 1
        %s1358 = scalar_select %p1357, %s35, 1
        %s1359 = smul.addr %s1358, 4
        %s1360 = scalar_lea.vmem %s10, %s1359
        %s1361 = sand.u32 %s289, 1
        %s1362 = scalar_lea.sflag [#allocation6], %s1361
        %s1363 = sand.u32 %s289, 1
        %s1364 = smul.addr %s1363, 4
        %s1365 = scalar_lea.vmem [#allocation13], %s1364
        // Predicated region
        $region77: #{tpu_custom_call.1} parent=55 // pred_check
          %p1366 = pneg %p247
        $region78: #{tpu_custom_call.1} parent=55 // pred_check_branch
          %1368 = sbr.rel (%p1366) target = $region80
        $region79: #{tpu_custom_call.1} parent=55 // pred_region
          _
        $region80: #{tpu_custom_call.1} parent=55 // pred_fallthru
          _
        // Predicated region
        $region81: #{tpu_custom_call.1} parent=55 // pred_check
          %p1369 = pneg %p273
        $region82: #{tpu_custom_call.1} parent=55 // pred_check_branch
          %1371 = sbr.rel (%p1369) target = $region84
        $region83: #{tpu_custom_call.1} parent=55 // pred_region
          _
        $region84: #{tpu_custom_call.1} parent=55 // pred_fallthru
          _
        // Predicated region
        $region85: #{tpu_custom_call.1} parent=55 // pred_check
          %p1372 = pneg %p299
        $region86: #{tpu_custom_call.1} parent=55 // pred_check_branch
          %1374 = sbr.rel (%p1372) target = $region88
        $region87: #{tpu_custom_call.1} parent=55 // pred_region
          %1376 = vsyncadd %s1362, 0
          %s1377 = smul.addr %s35, 4
          %s1378 = scalar_lea.hbm %s11, %s1377
          %s1380 = sshll.u32 %s1365, 4
          %s1381 = int_to_ptr.vmem [resolvable:$true] %s1380
          %s1382 = sshll.u32 %s1378, 4
          %s1383 = int_to_ptr.hbm [resolvable:$true] %s1382
          %1385 = dma.vmem_to_hbm [thread:$0]  %s1381, 64, %s1383, %s1362
        $region88: #{tpu_custom_call.1} parent=55 // pred_fallthru
          _
      $region56: #{tpu_custom_call.1} parent=5 // pred_fallthru
        _
      %p1386 = scmp.le.s32.totalorder 2, %s30
      // Predicated region
      $region89: #{tpu_custom_call.1} parent=5 // pred_check
        %p1387 = pneg %p1386
      $region90: #{tpu_custom_call.1} parent=5 // pred_check_branch
        %1389 = sbr.rel (%p1387) target = $region92
      $region91: #{tpu_custom_call.1} parent=5 // pred_region
        %s1390 = ssub.s32 %s30, 2
        // Predicated region
        $region93: #{tpu_custom_call.1} parent=91 // pred_check
          %p1391 = pneg %p253
        $region94: #{tpu_custom_call.1} parent=91 // pred_check_branch
          %1393 = sbr.rel (%p1391) target = $region96
        $region95: #{tpu_custom_call.1} parent=91 // pred_region
          %p1394 = scmp.lt.s32.totalorder %s36, 1
          %s1395 = scalar_select %p1394, %s36, 1
          %s1396 = smul.addr %s1395, 4
          %s1397 = scalar_lea.vmem %s9, %s1396
        $region96: #{tpu_custom_call.1} parent=91 // pred_fallthru
          _
        // Predicated region
        $region97: #{tpu_custom_call.1} parent=91 // pred_check
          %p1398 = pneg %p279
        $region98: #{tpu_custom_call.1} parent=91 // pred_check_branch
          %1400 = sbr.rel (%p1398) target = $region100
        $region99: #{tpu_custom_call.1} parent=91 // pred_region
          %p1401 = scmp.lt.s32.totalorder %s36, 1
          %s1402 = scalar_select %p1401, %s36, 1
          %s1403 = smul.addr %s1402, 4
          %s1404 = scalar_lea.vmem %s10, %s1403
        $region100: #{tpu_custom_call.1} parent=91 // pred_fallthru
          _
        // Predicated region
        $region101: #{tpu_custom_call.1} parent=91 // pred_check
          %p1405 = pneg %p305
        $region102: #{tpu_custom_call.1} parent=91 // pred_check_branch
          %1407 = sbr.rel (%p1405) target = $region104
        $region103: #{tpu_custom_call.1} parent=91 // pred_region
          %s1408 = sand.u32 %s290, 1
          %s1409 = scalar_lea.sflag [#allocation6], %s1408
          %s1410 = sand.u32 %s290, 1
          %s1411 = smul.addr %s1410, 4
          %s1412 = scalar_lea.vmem [#allocation13], %s1411
          %1414 = dma.done %s1409, 64
        $region104: #{tpu_custom_call.1} parent=91 // pred_fallthru
          _
      $region92: #{tpu_custom_call.1} parent=5 // pred_fallthru
        _
    $region6: #{tpu_custom_call.1} parent=1 // loop_footer
      %s34 = sadd.s32 1, %s30
    $region7: #{tpu_custom_call.1} parent=1 // loop_footer_branch
      %29 = sbr.rel target = $region3
    $region8: #{tpu_custom_call.1} parent=1 // loop_exit
      _
    %1415 = vsyncpa [#allocation5], 1
    %s1416 = scalar_lea.sflag [#allocation5], 1
    %1417 = vsyncpa %s1416, 1
    %1418 = vsyncpa [#allocation8], 1
    %1419 = vsyncpa [#allocation11], 1
    %1420 = vsyncpa [#allocation6], 1
    %s1421 = scalar_lea.sflag [#allocation6], 1
    %1422 = vsyncpa %s1421, 1

</llo_original>
